<compile_context>
chip_gen: v7x
topology: tpu7x:2x2x1
jax: 0.10.0
libtpu: 0.0.40
codegen_flags: <defaults>
</compile_context>

<pallas_src>
import functools

import jax
import jax.numpy as jnp
from jax import lax
from jax.experimental import pallas as pl
from jax.experimental.pallas import tpu as pltpu


def _round_up(x, m):
    return (x + m - 1) // m * m


def _cdiv(a, b):
    return (a + b - 1) // b


def _make_dwconv_kernel(K, rows):
    """Build the depthwise-conv kernel body for a given (static) K and row chunk."""
    p = K // 2

    def kernel(x_ref, w_ref, o_ref, xpad_ref):
        # x_ref   : (1, H, W, TC)          NHWC input block (unpadded), VMEM
        # w_ref   : (K*K, TC)              per-tap per-channel weights, C on lanes
        # o_ref   : (1, H, W, TC)          NHWC output block, VMEM
        # xpad_ref: (H+2p, W+2p, TC) f32   scratch: zero-padded copy of the input
        _, H, W, TC = o_ref.shape
        Hp, Wp = H + 2 * p, W + 2 * p

        # Build the zero-padded tile in VMEM (halo handled in-kernel, no HBM
        # pre-pad).  Only the thin border strips need zeroing each step.
        if p > 0:
            zrow = jnp.zeros((p, Wp, TC), jnp.float32)
            xpad_ref[0:p, :, :] = zrow
            xpad_ref[Hp - p:Hp, :, :] = zrow
            zcol = jnp.zeros((Hp, p, TC), jnp.float32)
            xpad_ref[:, 0:p, :] = zcol
            xpad_ref[:, Wp - p:Wp, :] = zcol
        xpad_ref[p:p + H, p:p + W, :] = x_ref[0].astype(jnp.float32)

        # Static unroll over output row-chunks.  Each chunk accumulates all K*K
        # taps in vregs (no per-tap VMEM RMW) and issues one lane-dense store.
        # Tap shifts touch only leading (H) / sublane (W) axes of the padded
        # scratch; the lane (channel) axis is untouched.
        for h0 in range(0, H, rows):
            hs = min(rows, H - h0)
            acc = None
            for kh in range(K):
                for kw in range(K):
                    tap = kh * K + kw
                    wv = w_ref[tap].astype(jnp.float32)                 # (TC,)
                    xs = xpad_ref[h0 + kh:h0 + kh + hs, kw:kw + W, :]   # (hs,W,TC)
                    contrib = xs * wv
                    acc = contrib if acc is None else acc + contrib
            o_ref[0, h0:h0 + hs, :, :] = acc.astype(o_ref.dtype)

    return kernel


def _pick_channel_tile(C, H, W, K):
    """Lane-dense channel tile that keeps the per-block VMEM footprint safe."""
    p = K // 2

    def footprint(tc):
        lane = _round_up(tc, 128)
        blk = H * _round_up(W, 8) * lane * 4
        xpad = (H + 2 * p) * _round_up(W + 2 * p, 8) * lane * 4
        # double-buffered in + double-buffered out + pad scratch
        return 2 * blk + 2 * blk + xpad

    if C % 128 == 0:
        for tc in (512, 384, 256, 128):
            if C % tc == 0 and footprint(tc) <= (40 << 20):
                return tc
        return 128
    return C


def _pick_row_chunk(H, W, TC):
    """Rows of output per register-resident accumulation chunk (~16 acc vregs)."""
    per_row_vregs = _cdiv(W, 8) * _cdiv(TC, 128)
    return max(1, min(H, 16 // max(1, per_row_vregs)))


def depth_sep_conv2d(x, weight):
    """Depthwise conv2d, stride 1, 'same' zero padding, no bias.

    x:      (N, C, H, W)  (PyTorch NCHW layout)
    weight: (C, 1, K, K)  (PyTorch depthwise layout), odd K
    returns (N, C, H, W)
    """
    N, C, H, W = x.shape
    K = weight.shape[-1]
    assert weight.shape == (C, 1, K, K)
    assert K % 2 == 1, "only odd kernel sizes give 'same'-shaped outputs"
    p = K // 2

    # Layout plumbing (plain JAX): NCHW -> NHWC so C is the lane axis, and
    # (C,1,K,K) -> (K*K, C) so each tap is a per-channel lane vector.
    # TODO(synk): in a full model, carry activations NHWC end-to-end to drop these transposes.
    x_nhwc = jnp.transpose(x, (0, 2, 3, 1))
    w_taps = jnp.transpose(weight.reshape(C, K * K), (1, 0))   # (K*K, C)

    TC = _pick_channel_tile(C, H, W, K)
    rows = _pick_row_chunk(H, W, TC)
    grid = (N, C // TC)          # both axes fully parallel (no reduction axis)

    # VMEM budget: double-buffered in/out blocks + weights + pad scratch (with
    # (8,128) tiling padding), generous headroom; stays within v7x's 64 MiB.
    lane = _round_up(TC, 128)
    blk = H * _round_up(W, 8) * lane * 4
    wts = _round_up(K * K, 8) * lane * 4
    xpad = (H + 2 * p) * _round_up(W + 2 * p, 8) * lane * 4
    vmem_est = 2 * blk + 2 * blk + 2 * wts + xpad
    vmem_limit = int(min(max(2 * vmem_est, 16 << 20), 64 << 20))

    itemsize = jnp.dtype(x.dtype).itemsize
    cost = pl.CostEstimate(
        flops=2 * N * C * H * W * K * K,
        transcendentals=0,
        bytes_accessed=(2 * N * C * H * W + K * K * C) * itemsize,
    )

    kernel = _make_dwconv_kernel(K, rows)

    out_nhwc = pl.pallas_call(
        kernel,
        out_shape=jax.ShapeDtypeStruct((N, H, W, C), x.dtype),
        grid_spec=pltpu.PrefetchScalarGridSpec(
            num_scalar_prefetch=0,
            grid=grid,
            in_specs=[
                pl.BlockSpec((1, H, W, TC), lambda n, c: (n, 0, 0, c)),
                pl.BlockSpec((K * K, TC), lambda n, c: (0, c)),
            ],
            out_specs=pl.BlockSpec((1, H, W, TC), lambda n, c: (n, 0, 0, c)),
            scratch_shapes=[
                pltpu.VMEM((H + 2 * p, W + 2 * p, TC), jnp.float32),
            ],
        ),
        compiler_params=pltpu.CompilerParams(
            dimension_semantics=("parallel", "parallel"),
            vmem_limit_bytes=vmem_limit,
        ),
        cost_estimate=cost,
    )(x_nhwc, w_taps)

    return jnp.transpose(out_nhwc, (0, 3, 1, 2))


def _reference_dwconv(x, weight):
    # XLA reference: grouped conv with feature_group_count = C.
    C = x.shape[1]
    return lax.conv_general_dilated(
        x, weight,
        window_strides=(1, 1),
        padding="SAME",
        dimension_numbers=("NCHW", "OIHW", "NCHW"),
        feature_group_count=C,
    )


if __name__ == "__main__":
    key = jax.random.PRNGKey(0)
    kx, kw = jax.random.split(key)

    N, C, H, W, K = 2, 4, 16, 16, 3
    x = jax.random.normal(kx, (N, C, H, W), dtype=jnp.float32)
    # Shape matches nn.Conv2d(C, C, K, groups=C, bias=False).weight
    weight = jax.random.normal(kw, (C, 1, K, K), dtype=jnp.float32) * 0.1

    out = jax.block_until_ready(depth_sep_conv2d(x, weight))
    ref = jax.block_until_ready(_reference_dwconv(x, weight))

    assert out.shape == (N, C, H, W)
    assert jnp.allclose(out, ref, atol=1e-5, rtol=1e-5), "mismatch vs XLA reference"

    print("KERNEL_OK")
</pallas_src>

<mosaic_0001>
module attributes {stable_mosaic.version = 11 : i64} {
  func.func @kernel(%arg0: i32, %arg1: i32, %arg2: memref<1x16x16x4xf32, #tpu.memory_space<vmem>>, %arg3: memref<9x4xf32, #tpu.memory_space<vmem>>, %arg4: memref<1x16x16x4xf32, #tpu.memory_space<vmem>>, %arg5: memref<18x18x4xf32, #tpu.memory_space<vmem>>) attributes {dimension_semantics = [#tpu.dimension_semantics<parallel>, #tpu.dimension_semantics<parallel>], iteration_bounds = array<i64: 2, 1>, scalar_prefetch = 0 : i64, scratch_operands = 1 : i64, tpu.core_type = #tpu.core_type<tc>, window_params = [{transform_indices = @transform_0, window_bounds = array<i64: 1, 16, 16, 4>}, {transform_indices = @transform_1, window_bounds = array<i64: 9, 4>}, {transform_indices = @transform_2, window_bounds = array<i64: 1, 16, 16, 4>}]} {
    %cst = arith.constant 0.000000e+00 : f32
    %0 = vector.broadcast %cst : f32 to vector<1x18x4xf32>
    %c0 = arith.constant 0 : index
    %c0_0 = arith.constant 0 : index
    %c0_1 = arith.constant 0 : index
    %1 = vector.load %arg5[%c0, %c0_0, %c0_1] : memref<18x18x4xf32, #tpu.memory_space<vmem>>, vector<1x18x4xf32>
    tpu.vector_store %arg5[%c0, %c0_0, %c0_1], %0 {strides = array<i32>} : memref<18x18x4xf32, #tpu.memory_space<vmem>>, vector<1x18x4xf32>,
    %c17 = arith.constant 17 : index
    %c0_2 = arith.constant 0 : index
    %c0_3 = arith.constant 0 : index
    %2 = vector.load %arg5[%c17, %c0_2, %c0_3] : memref<18x18x4xf32, #tpu.memory_space<vmem>>, vector<1x18x4xf32>
    tpu.vector_store %arg5[%c17, %c0_2, %c0_3], %0 {strides = array<i32>} : memref<18x18x4xf32, #tpu.memory_space<vmem>>, vector<1x18x4xf32>,
    %cst_4 = arith.constant 0.000000e+00 : f32
    %3 = vector.broadcast %cst_4 : f32 to vector<18x1x4xf32>
    %c0_5 = arith.constant 0 : index
    %c0_6 = arith.constant 0 : index
    %c0_7 = arith.constant 0 : index
    %4 = vector.load %arg5[%c0_5, %c0_6, %c0_7] : memref<18x18x4xf32, #tpu.memory_space<vmem>>, vector<18x1x4xf32>
    tpu.vector_store %arg5[%c0_5, %c0_6, %c0_7], %3 {strides = array<i32>} : memref<18x18x4xf32, #tpu.memory_space<vmem>>, vector<18x1x4xf32>,
    %c0_8 = arith.constant 0 : index
    %c17_9 = arith.constant 17 : index
    %c0_10 = arith.constant 0 : index
    %5 = vector.load %arg5[%c0_8, %c17_9, %c0_10] : memref<18x18x4xf32, #tpu.memory_space<vmem>>, vector<18x1x4xf32>
    tpu.vector_store %arg5[%c0_8, %c17_9, %c0_10], %3 {strides = array<i32>} : memref<18x18x4xf32, #tpu.memory_space<vmem>>, vector<18x1x4xf32>,
    %c0_11 = arith.constant 0 : index
    %c0_12 = arith.constant 0 : index
    %c0_13 = arith.constant 0 : index
    %c0_14 = arith.constant 0 : index
    %6 = vector.load %arg2[%c0_11, %c0_12, %c0_13, %c0_14] : memref<1x16x16x4xf32, #tpu.memory_space<vmem>>, vector<1x16x16x4xf32>
    %7 = vector.shape_cast %6 : vector<1x16x16x4xf32> to vector<16x16x4xf32>
    %c1 = arith.constant 1 : index
    %c1_15 = arith.constant 1 : index
    %c0_16 = arith.constant 0 : index
    %8 = vector.load %arg5[%c1, %c1_15, %c0_16] : memref<18x18x4xf32, #tpu.memory_space<vmem>>, vector<16x16x4xf32>
    tpu.vector_store %arg5[%c1, %c1_15, %c0_16], %7 {strides = array<i32>} : memref<18x18x4xf32, #tpu.memory_space<vmem>>, vector<16x16x4xf32>,
    %c0_17 = arith.constant 0 : index
    %c0_18 = arith.constant 0 : index
    %9 = vector.load %arg3[%c0_17, %c0_18] : memref<9x4xf32, #tpu.memory_space<vmem>>, vector<1x4xf32>
    %10 = vector.shape_cast %9 : vector<1x4xf32> to vector<4xf32>
    %c0_19 = arith.constant 0 : index
    %c0_20 = arith.constant 0 : index
    %c0_21 = arith.constant 0 : index
    %11 = vector.load %arg5[%c0_19, %c0_20, %c0_21] : memref<18x18x4xf32, #tpu.memory_space<vmem>>, vector<8x16x4xf32>
    %12 = vector.shape_cast %10 : vector<4xf32> to vector<1x1x4xf32>
    %13 = vector.broadcast %12 : vector<1x1x4xf32> to vector<8x16x4xf32>
    %14 = arith.mulf %11, %13 : vector<8x16x4xf32>
    %c1_22 = arith.constant 1 : index
    %c0_23 = arith.constant 0 : index
    %15 = vector.load %arg3[%c1_22, %c0_23] : memref<9x4xf32, #tpu.memory_space<vmem>>, vector<1x4xf32>
    %16 = vector.shape_cast %15 : vector<1x4xf32> to vector<4xf32>
    %c0_24 = arith.constant 0 : index
    %c1_25 = arith.constant 1 : index
    %c0_26 = arith.constant 0 : index
    %17 = vector.load %arg5[%c0_24, %c1_25, %c0_26] : memref<18x18x4xf32, #tpu.memory_space<vmem>>, vector<8x16x4xf32>
    %18 = vector.shape_cast %16 : vector<4xf32> to vector<1x1x4xf32>
    %19 = vector.broadcast %18 : vector<1x1x4xf32> to vector<8x16x4xf32>
    %20 = arith.mulf %17, %19 : vector<8x16x4xf32>
    %21 = arith.addf %14, %20 : vector<8x16x4xf32>
    %c2 = arith.constant 2 : index
    %c0_27 = arith.constant 0 : index
    %22 = vector.load %arg3[%c2, %c0_27] : memref<9x4xf32, #tpu.memory_space<vmem>>, vector<1x4xf32>
    %23 = vector.shape_cast %22 : vector<1x4xf32> to vector<4xf32>
    %c0_28 = arith.constant 0 : index
    %c2_29 = arith.constant 2 : index
    %c0_30 = arith.constant 0 : index
    %24 = vector.load %arg5[%c0_28, %c2_29, %c0_30] : memref<18x18x4xf32, #tpu.memory_space<vmem>>, vector<8x16x4xf32>
    %25 = vector.shape_cast %23 : vector<4xf32> to vector<1x1x4xf32>
    %26 = vector.broadcast %25 : vector<1x1x4xf32> to vector<8x16x4xf32>
    %27 = arith.mulf %24, %26 : vector<8x16x4xf32>
    %28 = arith.addf %21, %27 : vector<8x16x4xf32>
    %c3 = arith.constant 3 : index
    %c0_31 = arith.constant 0 : index
    %29 = vector.load %arg3[%c3, %c0_31] : memref<9x4xf32, #tpu.memory_space<vmem>>, vector<1x4xf32>
    %30 = vector.shape_cast %29 : vector<1x4xf32> to vector<4xf32>
    %c1_32 = arith.constant 1 : index
    %c0_33 = arith.constant 0 : index
    %c0_34 = arith.constant 0 : index
    %31 = vector.load %arg5[%c1_32, %c0_33, %c0_34] : memref<18x18x4xf32, #tpu.memory_space<vmem>>, vector<8x16x4xf32>
    %32 = vector.shape_cast %30 : vector<4xf32> to vector<1x1x4xf32>
    %33 = vector.broadcast %32 : vector<1x1x4xf32> to vector<8x16x4xf32>
    %34 = arith.mulf %31, %33 : vector<8x16x4xf32>
    %35 = arith.addf %28, %34 : vector<8x16x4xf32>
    %c4 = arith.constant 4 : index
    %c0_35 = arith.constant 0 : index
    %36 = vector.load %arg3[%c4, %c0_35] : memref<9x4xf32, #tpu.memory_space<vmem>>, vector<1x4xf32>
    %37 = vector.shape_cast %36 : vector<1x4xf32> to vector<4xf32>
    %c1_36 = arith.constant 1 : index
    %c1_37 = arith.constant 1 : index
    %c0_38 = arith.constant 0 : index
    %38 = vector.load %arg5[%c1_36, %c1_37, %c0_38] : memref<18x18x4xf32, #tpu.memory_space<vmem>>, vector<8x16x4xf32>
    %39 = vector.shape_cast %37 : vector<4xf32> to vector<1x1x4xf32>
    %40 = vector.broadcast %39 : vector<1x1x4xf32> to vector<8x16x4xf32>
    %41 = arith.mulf %38, %40 : vector<8x16x4xf32>
    %42 = arith.addf %35, %41 : vector<8x16x4xf32>
    %c5 = arith.constant 5 : index
    %c0_39 = arith.constant 0 : index
    %43 = vector.load %arg3[%c5, %c0_39] : memref<9x4xf32, #tpu.memory_space<vmem>>, vector<1x4xf32>
    %44 = vector.shape_cast %43 : vector<1x4xf32> to vector<4xf32>
    %c1_40 = arith.constant 1 : index
    %c2_41 = arith.constant 2 : index
    %c0_42 = arith.constant 0 : index
    %45 = vector.load %arg5[%c1_40, %c2_41, %c0_42] : memref<18x18x4xf32, #tpu.memory_space<vmem>>, vector<8x16x4xf32>
    %46 = vector.shape_cast %44 : vector<4xf32> to vector<1x1x4xf32>
    %47 = vector.broadcast %46 : vector<1x1x4xf32> to vector<8x16x4xf32>
    %48 = arith.mulf %45, %47 : vector<8x16x4xf32>
    %49 = arith.addf %42, %48 : vector<8x16x4xf32>
    %c6 = arith.constant 6 : index
    %c0_43 = arith.constant 0 : index
    %50 = vector.load %arg3[%c6, %c0_43] : memref<9x4xf32, #tpu.memory_space<vmem>>, vector<1x4xf32>
    %51 = vector.shape_cast %50 : vector<1x4xf32> to vector<4xf32>
    %c2_44 = arith.constant 2 : index
    %c0_45 = arith.constant 0 : index
    %c0_46 = arith.constant 0 : index
    %52 = vector.load %arg5[%c2_44, %c0_45, %c0_46] : memref<18x18x4xf32, #tpu.memory_space<vmem>>, vector<8x16x4xf32>
    %53 = vector.shape_cast %51 : vector<4xf32> to vector<1x1x4xf32>
    %54 = vector.broadcast %53 : vector<1x1x4xf32> to vector<8x16x4xf32>
    %55 = arith.mulf %52, %54 : vector<8x16x4xf32>
    %56 = arith.addf %49, %55 : vector<8x16x4xf32>
    %c7 = arith.constant 7 : index
    %c0_47 = arith.constant 0 : index
    %57 = vector.load %arg3[%c7, %c0_47] : memref<9x4xf32, #tpu.memory_space<vmem>>, vector<1x4xf32>
    %58 = vector.shape_cast %57 : vector<1x4xf32> to vector<4xf32>
    %c2_48 = arith.constant 2 : index
    %c1_49 = arith.constant 1 : index
    %c0_50 = arith.constant 0 : index
    %59 = vector.load %arg5[%c2_48, %c1_49, %c0_50] : memref<18x18x4xf32, #tpu.memory_space<vmem>>, vector<8x16x4xf32>
    %60 = vector.shape_cast %58 : vector<4xf32> to vector<1x1x4xf32>
    %61 = vector.broadcast %60 : vector<1x1x4xf32> to vector<8x16x4xf32>
    %62 = arith.mulf %59, %61 : vector<8x16x4xf32>
    %63 = arith.addf %56, %62 : vector<8x16x4xf32>
    %c8 = arith.constant 8 : index
    %c0_51 = arith.constant 0 : index
    %64 = vector.load %arg3[%c8, %c0_51] : memref<9x4xf32, #tpu.memory_space<vmem>>, vector<1x4xf32>
    %65 = vector.shape_cast %64 : vector<1x4xf32> to vector<4xf32>
    %c2_52 = arith.constant 2 : index
    %c2_53 = arith.constant 2 : index
    %c0_54 = arith.constant 0 : index
    %66 = vector.load %arg5[%c2_52, %c2_53, %c0_54] : memref<18x18x4xf32, #tpu.memory_space<vmem>>, vector<8x16x4xf32>
    %67 = vector.shape_cast %65 : vector<4xf32> to vector<1x1x4xf32>
    %68 = vector.broadcast %67 : vector<1x1x4xf32> to vector<8x16x4xf32>
    %69 = arith.mulf %66, %68 : vector<8x16x4xf32>
    %70 = arith.addf %63, %69 : vector<8x16x4xf32>
    %c0_55 = arith.constant 0 : index
    %c0_56 = arith.constant 0 : index
    %c0_57 = arith.constant 0 : index
    %c0_58 = arith.constant 0 : index
    %71 = vector.load %arg4[%c0_55, %c0_56, %c0_57, %c0_58] : memref<1x16x16x4xf32, #tpu.memory_space<vmem>>, vector<1x8x16x4xf32>
    %72 = vector.shape_cast %71 : vector<1x8x16x4xf32> to vector<8x16x4xf32>
    %73 = vector.shape_cast %70 : vector<8x16x4xf32> to vector<1x8x16x4xf32>
    tpu.vector_store %arg4[%c0_55, %c0_56, %c0_57, %c0_58], %73 {strides = array<i32>} : memref<1x16x16x4xf32, #tpu.memory_space<vmem>>, vector<1x8x16x4xf32>,
    %c0_59 = arith.constant 0 : index
    %c0_60 = arith.constant 0 : index
    %74 = vector.load %arg3[%c0_59, %c0_60] : memref<9x4xf32, #tpu.memory_space<vmem>>, vector<1x4xf32>
    %75 = vector.shape_cast %74 : vector<1x4xf32> to vector<4xf32>
    %c8_61 = arith.constant 8 : index
    %c0_62 = arith.constant 0 : index
    %c0_63 = arith.constant 0 : index
    %76 = vector.load %arg5[%c8_61, %c0_62, %c0_63] : memref<18x18x4xf32, #tpu.memory_space<vmem>>, vector<8x16x4xf32>
    %77 = vector.shape_cast %75 : vector<4xf32> to vector<1x1x4xf32>
    %78 = vector.broadcast %77 : vector<1x1x4xf32> to vector<8x16x4xf32>
    %79 = arith.mulf %76, %78 : vector<8x16x4xf32>
    %c1_64 = arith.constant 1 : index
    %c0_65 = arith.constant 0 : index
    %80 = vector.load %arg3[%c1_64, %c0_65] : memref<9x4xf32, #tpu.memory_space<vmem>>, vector<1x4xf32>
    %81 = vector.shape_cast %80 : vector<1x4xf32> to vector<4xf32>
    %c8_66 = arith.constant 8 : index
    %c1_67 = arith.constant 1 : index
    %c0_68 = arith.constant 0 : index
    %82 = vector.load %arg5[%c8_66, %c1_67, %c0_68] : memref<18x18x4xf32, #tpu.memory_space<vmem>>, vector<8x16x4xf32>
    %83 = vector.shape_cast %81 : vector<4xf32> to vector<1x1x4xf32>
    %84 = vector.broadcast %83 : vector<1x1x4xf32> to vector<8x16x4xf32>
    %85 = arith.mulf %82, %84 : vector<8x16x4xf32>
    %86 = arith.addf %79, %85 : vector<8x16x4xf32>
    %c2_69 = arith.constant 2 : index
    %c0_70 = arith.constant 0 : index
    %87 = vector.load %arg3[%c2_69, %c0_70] : memref<9x4xf32, #tpu.memory_space<vmem>>, vector<1x4xf32>
    %88 = vector.shape_cast %87 : vector<1x4xf32> to vector<4xf32>
    %c8_71 = arith.constant 8 : index
    %c2_72 = arith.constant 2 : index
    %c0_73 = arith.constant 0 : index
    %89 = vector.load %arg5[%c8_71, %c2_72, %c0_73] : memref<18x18x4xf32, #tpu.memory_space<vmem>>, vector<8x16x4xf32>
    %90 = vector.shape_cast %88 : vector<4xf32> to vector<1x1x4xf32>
    %91 = vector.broadcast %90 : vector<1x1x4xf32> to vector<8x16x4xf32>
    %92 = arith.mulf %89, %91 : vector<8x16x4xf32>
    %93 = arith.addf %86, %92 : vector<8x16x4xf32>
    %c3_74 = arith.constant 3 : index
    %c0_75 = arith.constant 0 : index
    %94 = vector.load %arg3[%c3_74, %c0_75] : memref<9x4xf32, #tpu.memory_space<vmem>>, vector<1x4xf32>
    %95 = vector.shape_cast %94 : vector<1x4xf32> to vector<4xf32>
    %c9 = arith.constant 9 : index
    %c0_76 = arith.constant 0 : index
    %c0_77 = arith.constant 0 : index
    %96 = vector.load %arg5[%c9, %c0_76, %c0_77] : memref<18x18x4xf32, #tpu.memory_space<vmem>>, vector<8x16x4xf32>
    %97 = vector.shape_cast %95 : vector<4xf32> to vector<1x1x4xf32>
    %98 = vector.broadcast %97 : vector<1x1x4xf32> to vector<8x16x4xf32>
    %99 = arith.mulf %96, %98 : vector<8x16x4xf32>
    %100 = arith.addf %93, %99 : vector<8x16x4xf32>
    %c4_78 = arith.constant 4 : index
    %c0_79 = arith.constant 0 : index
    %101 = vector.load %arg3[%c4_78, %c0_79] : memref<9x4xf32, #tpu.memory_space<vmem>>, vector<1x4xf32>
    %102 = vector.shape_cast %101 : vector<1x4xf32> to vector<4xf32>
    %c9_80 = arith.constant 9 : index
    %c1_81 = arith.constant 1 : index
    %c0_82 = arith.constant 0 : index
    %103 = vector.load %arg5[%c9_80, %c1_81, %c0_82] : memref<18x18x4xf32, #tpu.memory_space<vmem>>, vector<8x16x4xf32>
    %104 = vector.shape_cast %102 : vector<4xf32> to vector<1x1x4xf32>
    %105 = vector.broadcast %104 : vector<1x1x4xf32> to vector<8x16x4xf32>
    %106 = arith.mulf %103, %105 : vector<8x16x4xf32>
    %107 = arith.addf %100, %106 : vector<8x16x4xf32>
    %c5_83 = arith.constant 5 : index
    %c0_84 = arith.constant 0 : index
    %108 = vector.load %arg3[%c5_83, %c0_84] : memref<9x4xf32, #tpu.memory_space<vmem>>, vector<1x4xf32>
    %109 = vector.shape_cast %108 : vector<1x4xf32> to vector<4xf32>
    %c9_85 = arith.constant 9 : index
    %c2_86 = arith.constant 2 : index
    %c0_87 = arith.constant 0 : index
    %110 = vector.load %arg5[%c9_85, %c2_86, %c0_87] : memref<18x18x4xf32, #tpu.memory_space<vmem>>, vector<8x16x4xf32>
    %111 = vector.shape_cast %109 : vector<4xf32> to vector<1x1x4xf32>
    %112 = vector.broadcast %111 : vector<1x1x4xf32> to vector<8x16x4xf32>
    %113 = arith.mulf %110, %112 : vector<8x16x4xf32>
    %114 = arith.addf %107, %113 : vector<8x16x4xf32>
    %c6_88 = arith.constant 6 : index
    %c0_89 = arith.constant 0 : index
    %115 = vector.load %arg3[%c6_88, %c0_89] : memref<9x4xf32, #tpu.memory_space<vmem>>, vector<1x4xf32>
    %116 = vector.shape_cast %115 : vector<1x4xf32> to vector<4xf32>
    %c10 = arith.constant 10 : index
    %c0_90 = arith.constant 0 : index
    %c0_91 = arith.constant 0 : index
    %117 = vector.load %arg5[%c10, %c0_90, %c0_91] : memref<18x18x4xf32, #tpu.memory_space<vmem>>, vector<8x16x4xf32>
    %118 = vector.shape_cast %116 : vector<4xf32> to vector<1x1x4xf32>
    %119 = vector.broadcast %118 : vector<1x1x4xf32> to vector<8x16x4xf32>
    %120 = arith.mulf %117, %119 : vector<8x16x4xf32>
    %121 = arith.addf %114, %120 : vector<8x16x4xf32>
    %c7_92 = arith.constant 7 : index
    %c0_93 = arith.constant 0 : index
    %122 = vector.load %arg3[%c7_92, %c0_93] : memref<9x4xf32, #tpu.memory_space<vmem>>, vector<1x4xf32>
    %123 = vector.shape_cast %122 : vector<1x4xf32> to vector<4xf32>
    %c10_94 = arith.constant 10 : index
    %c1_95 = arith.constant 1 : index
    %c0_96 = arith.constant 0 : index
    %124 = vector.load %arg5[%c10_94, %c1_95, %c0_96] : memref<18x18x4xf32, #tpu.memory_space<vmem>>, vector<8x16x4xf32>
    %125 = vector.shape_cast %123 : vector<4xf32> to vector<1x1x4xf32>
    %126 = vector.broadcast %125 : vector<1x1x4xf32> to vector<8x16x4xf32>
    %127 = arith.mulf %124, %126 : vector<8x16x4xf32>
    %128 = arith.addf %121, %127 : vector<8x16x4xf32>
    %c8_97 = arith.constant 8 : index
    %c0_98 = arith.constant 0 : index
    %129 = vector.load %arg3[%c8_97, %c0_98] : memref<9x4xf32, #tpu.memory_space<vmem>>, vector<1x4xf32>
    %130 = vector.shape_cast %129 : vector<1x4xf32> to vector<4xf32>
    %c10_99 = arith.constant 10 : index
    %c2_100 = arith.constant 2 : index
    %c0_101 = arith.constant 0 : index
    %131 = vector.load %arg5[%c10_99, %c2_100, %c0_101] : memref<18x18x4xf32, #tpu.memory_space<vmem>>, vector<8x16x4xf32>
    %132 = vector.shape_cast %130 : vector<4xf32> to vector<1x1x4xf32>
    %133 = vector.broadcast %132 : vector<1x1x4xf32> to vector<8x16x4xf32>
    %134 = arith.mulf %131, %133 : vector<8x16x4xf32>
    %135 = arith.addf %128, %134 : vector<8x16x4xf32>
    %c0_102 = arith.constant 0 : index
    %c8_103 = arith.constant 8 : index
    %c0_104 = arith.constant 0 : index
    %c0_105 = arith.constant 0 : index
    %136 = vector.load %arg4[%c0_102, %c8_103, %c0_104, %c0_105] : memref<1x16x16x4xf32, #tpu.memory_space<vmem>>, vector<1x8x16x4xf32>
    %137 = vector.shape_cast %136 : vector<1x8x16x4xf32> to vector<8x16x4xf32>
    %138 = vector.shape_cast %135 : vector<8x16x4xf32> to vector<1x8x16x4xf32>
    tpu.vector_store %arg4[%c0_102, %c8_103, %c0_104, %c0_105], %138 {strides = array<i32>} : memref<1x16x16x4xf32, #tpu.memory_space<vmem>>, vector<1x8x16x4xf32>,
    return
  }
  func.func @transform_0(%arg0: i32, %arg1: i32) -> (i32, i32, i32, i32) {
    %c0_i32 = arith.constant 0 : i32
    %c0_i32_0 = arith.constant 0 : i32
    %c0_i32_1 = arith.constant 0 : i32
    return %arg0, %c0_i32, %c0_i32_0, %arg1 : i32, i32, i32, i32
  }
  func.func @transform_1(%arg0: i32, %arg1: i32) -> (i32, i32) {
    %c0_i32 = arith.constant 0 : i32
    %c0_i32_0 = arith.constant 0 : i32
    return %c0_i32, %arg1 : i32, i32
  }
  func.func @transform_2(%arg0: i32, %arg1: i32) -> (i32, i32, i32, i32) {
    %c0_i32 = arith.constant 0 : i32
    %c0_i32_0 = arith.constant 0 : i32
    %c0_i32_1 = arith.constant 0 : i32
    return %arg0, %c0_i32, %c0_i32_0, %arg1 : i32, i32, i32, i32
  }
}

</mosaic_0001>

<llo_original>
// kernel: tpu_custom_call.1
$region0: #{tpu_custom_call.1}
  #allocation0 [shape = 'u32[]', space=smem, size = 0x4, offset = 0x4, fixed_abs, tag = 'smem constant byte address 0x4 - core index']
  #allocation1 [shape = 'u32[144,128]{1,0:T(1,128)}', space=vmem, size = 0x12000, scoped, tag = 'internal scratch']
  #allocation2 [shape = 'f32[18,18,4]{2,1,0:T(8,128)}', space=vmem, size = 0x36000, scoped, tag = 'scratch operand']
  %s0 = inlined_call_operand.vmem [shape: f32[2,16,16,4], index: 0, kind: input, shape index: {}]
  %s1 = inlined_call_operand.vmem [shape: f32[9,4], index: 1, kind: input, shape index: {}]
  %s2 = inlined_call_operand.vmem [shape: f32[2,16,16,4], index: 2, kind: output, shape index: {}]
  %s3 = sld [smem:[#allocation0]]
  $region41: #{tpu_custom_call.1} parent=0
    _
  %s5 = ssub.s32 1, %s3
  %s6 = scalar_select 0, %s5, %s3
  loop: start=0, step=1, limit=4
  $region2: #{tpu_custom_call.1} parent=0 // loop_pre_header
    _
  $region3: #{tpu_custom_call.1} parent=0 // loop_header
    %s8 = sphi 0, %s12
    %p9 = scmp.ge.s32.totalorder %s8, 4
    %s15 = sphi 0, %s27
    %s16 = sphi 0, %s23
    %s17 = sphi 0, %s15
    %s18 = sphi 0, %s16
    %s19 = sphi 0, %s17
    %s20 = sphi 0, %s18
    %s32 = sphi 0, %s34
    %s35 = sphi 0, %s32
    %s36 = sphi 0, %s35
    %s52 = sphi 0, %s36
    %s58 = sphi 0, %s60
    %s61 = sphi 0, %s58
    %s62 = sphi 0, %s61
    %s78 = sphi 0, %s62
    %s86 = sphi 0, %s88
    %s89 = sphi 0, %s86
    %s90 = sphi 0, %s89
    %s106 = sphi 0, %s90
  $region4: #{tpu_custom_call.1} parent=0 // loop_header_branch
    %11 = sbr.rel (%p9) target = $region8
  $region5: #{tpu_custom_call.1} parent=0 // loop_body
    %s13 = ssub.s32 %s8, 1
    %s14 = ssub.s32 %s8, 2
    %s21 = sadd.s32 1, %s16
    %p22 = scmp.ge.s32.totalorder %s21, 1
    %s23 = scalar_select %p22, 0, %s21
    %s24 = sadd.s32 1, %s15
    %s25 = scalar_select %p22, %s24, %s15
    %p26 = scmp.ge.s32.totalorder %s25, 2
    %s27 = scalar_select %p26, 0, %s25
    %s28 = ssub.s32 %s15, %s27
    %s29 = ssub.s32 %s16, %s23
    %s30 = sor.u32 %s28, %s29
    %p31 = scmp.eq.s32.totalorder %s30, 0
    %s33 = sadd.s32 %s32, 1
    %s34 = scalar_select %p31, %s32, %s33
    %p37 = pneg %p31
    %p38 = scmp.eq.s32.totalorder %s8, 1
    %p39 = por %p37, %p38
    %p40 = scmp.ne.s32.totalorder %s32, %s35
    %p41 = scmp.eq.s32.totalorder %s8, 0
    %p42 = por %p40, %p41
    %p43 = scmp.ne.s32.totalorder %s32, %s35
    %p44 = scmp.eq.s32.totalorder %s13, 1
    %p45 = por %p43, %p44
    %p46 = scmp.ne.s32.totalorder %s35, %s36
    %p47 = scmp.eq.s32.totalorder %s13, 0
    %p48 = por %p46, %p47
    %p49 = scmp.ne.s32.totalorder %s35, %s36
    %p50 = scmp.eq.s32.totalorder %s14, 1
    %p51 = por %p49, %p50
    %p53 = scmp.ne.s32.totalorder %s36, %s52
    %p54 = scmp.eq.s32.totalorder %s14, 0
    %p55 = por %p53, %p54
    %s56 = ssub.s32 %s16, %s23
    %p57 = scmp.eq.s32.totalorder %s56, 0
    %s59 = sadd.s32 %s58, 1
    %s60 = scalar_select %p57, %s58, %s59
    %p63 = pneg %p57
    %p64 = scmp.eq.s32.totalorder %s8, 1
    %p65 = por %p63, %p64
    %p66 = scmp.ne.s32.totalorder %s58, %s61
    %p67 = scmp.eq.s32.totalorder %s8, 0
    %p68 = por %p66, %p67
    %p69 = scmp.ne.s32.totalorder %s58, %s61
    %p70 = scmp.eq.s32.totalorder %s13, 1
    %p71 = por %p69, %p70
    %p72 = scmp.ne.s32.totalorder %s61, %s62
    %p73 = scmp.eq.s32.totalorder %s13, 0
    %p74 = por %p72, %p73
    %p75 = scmp.ne.s32.totalorder %s61, %s62
    %p76 = scmp.eq.s32.totalorder %s14, 1
    %p77 = por %p75, %p76
    %p79 = scmp.ne.s32.totalorder %s62, %s78
    %p80 = scmp.eq.s32.totalorder %s14, 0
    %p81 = por %p79, %p80
    %s82 = ssub.s32 %s15, %s27
    %s83 = ssub.s32 %s16, %s23
    %s84 = sor.u32 %s82, %s83
    %p85 = scmp.eq.s32.totalorder %s84, 0
    %s87 = sadd.s32 %s86, 1
    %s88 = scalar_select %p85, %s86, %s87
    %p91 = pneg %p85
    %p92 = scmp.eq.s32.totalorder %s8, 1
    %p93 = por %p91, %p92
    %p94 = scmp.ne.s32.totalorder %s86, %s89
    %p95 = scmp.eq.s32.totalorder %s8, 0
    %p96 = por %p94, %p95
    %p97 = scmp.ne.s32.totalorder %s86, %s89
    %p98 = scmp.eq.s32.totalorder %s13, 1
    %p99 = por %p97, %p98
    %p100 = scmp.ne.s32.totalorder %s89, %s90
    %p101 = scmp.eq.s32.totalorder %s13, 0
    %p102 = por %p100, %p101
    %p103 = scmp.ne.s32.totalorder %s89, %s90
    %p104 = scmp.eq.s32.totalorder %s14, 1
    %p105 = por %p103, %p104
    %p107 = scmp.ne.s32.totalorder %s90, %s106
    %p108 = scmp.eq.s32.totalorder %s14, 0
    %p109 = por %p107, %p108
    %p110 = scmp.le.s32.totalorder 1, %s8
    %p111 = scmp.lt.s32.totalorder %s8, 3
    %p112 = pnand %p110, %p111
    %p113 = pneg %p112
    // Predicated region
    $region9: #{tpu_custom_call.1} parent=5 // pred_check
      _
    $region10: #{tpu_custom_call.1} parent=5 // pred_check_branch
      %115 = sbr.rel (%p112) target = $region12
    $region11: #{tpu_custom_call.1} parent=5 // pred_region
      %s116 = ssub.s32 %s8, 1
      // Predicated region
      $region13: #{tpu_custom_call.1} parent=11 // pred_check
        %p117 = pneg %p74
      $region14: #{tpu_custom_call.1} parent=11 // pred_check_branch
        %119 = sbr.rel (%p117) target = $region16
      $region15: #{tpu_custom_call.1} parent=11 // pred_region
        %p120 = scmp.lt.s32.totalorder %s18, 0
        %s121 = scalar_select %p120, %s18, 0
        %s122 = smul.addr %s121, 8
        %s123 = scalar_lea.vmem %s1, %s122
      $region16: #{tpu_custom_call.1} parent=11 // pred_fallthru
        _
    $region12: #{tpu_custom_call.1} parent=5 // pred_fallthru
      _
    %p124 = scmp.lt.s32.totalorder %s8, 2
    // Predicated region
    $region17: #{tpu_custom_call.1} parent=5 // pred_check
      %p125 = pneg %p124
    $region18: #{tpu_custom_call.1} parent=5 // pred_check_branch
      %127 = sbr.rel (%p125) target = $region20
    $region19: #{tpu_custom_call.1} parent=5 // pred_region
      // Predicated region
      $region21: #{tpu_custom_call.1} parent=19 // pred_check
        %p128 = pneg %p42
      $region22: #{tpu_custom_call.1} parent=19 // pred_check_branch
        %130 = sbr.rel (%p128) target = $region24
      $region23: #{tpu_custom_call.1} parent=19 // pred_region
        %p131 = scmp.lt.s32.totalorder %s15, 1
        %s132 = scalar_select %p131, %s15, 1
        %p133 = scmp.lt.s32.totalorder %s16, 0
        %s134 = scalar_select %p133, %s16, 0
        %s135 = smul.addr %s132, 32
        %s136 = sadd.s32 %s134, %s135
        %s137 = smul.addr %s136, 8
        %s138 = scalar_lea.vmem %s0, %s137
      $region24: #{tpu_custom_call.1} parent=19 // pred_fallthru
        _
    $region20: #{tpu_custom_call.1} parent=5 // pred_fallthru
      _
    %p139 = scmp.le.s32.totalorder 1, %s8
    %p140 = scmp.lt.s32.totalorder %s8, 3
    %p141 = pnand %p139, %p140
    %p142 = pneg %p141
    // Predicated region
    $region25: #{tpu_custom_call.1} parent=5 // pred_check
      _
    $region26: #{tpu_custom_call.1} parent=5 // pred_check_branch
      %144 = sbr.rel (%p141) target = $region28
    $region27: #{tpu_custom_call.1} parent=5 // pred_region
      %s145 = ssub.s32 %s8, 1
      %p146 = scmp.lt.s32.totalorder %s17, 1
      %s147 = scalar_select %p146, %s17, 1
      %p148 = scmp.lt.s32.totalorder %s18, 0
      %s149 = scalar_select %p148, %s18, 0
      %s150 = smul.addr %s147, 32
      %s151 = sadd.s32 %s149, %s150
      %s152 = smul.addr %s151, 8
      %s153 = scalar_lea.vmem %s0, %s152
      %p154 = pneg %p48
      %p155 = pneg %p45
      %p156 = scmp.lt.s32.totalorder %s18, 0
      %s157 = scalar_select %p156, %s18, 0
      %s158 = smul.addr %s157, 8
      %s159 = scalar_lea.vmem %s1, %s158
      %p160 = pneg %p74
      %p161 = pneg %p71
      %p162 = pneg %p102
      %p163 = pneg %p99
      %p164 = scmp.lt.s32.totalorder %s17, 1
      %s165 = scalar_select %p164, %s17, 1
      %p166 = scmp.lt.s32.totalorder %s18, 0
      %s167 = scalar_select %p166, %s18, 0
      %s168 = smul.addr %s165, 32
      %s169 = sadd.s32 %s167, %s168
      %s170 = smul.addr %s169, 8
      %s171 = scalar_lea.vmem %s2, %s170
      %p172 = scmp.lt.s32.totalorder %s17, 1
      %s173 = scalar_select %p172, %s17, 1
      %p174 = scmp.lt.s32.totalorder %s18, 0
      %s175 = scalar_select %p174, %s18, 0
      %s176 = smul.addr %s173, 32
      %s177 = sadd.s32 %s175, %s176
      %s178 = smul.addr %s177, 8
      %s179 = scalar_lea.vmem %s0, %s178
      %p180 = scmp.lt.s32.totalorder %s18, 0
      %s181 = scalar_select %p180, %s18, 0
      %s182 = smul.addr %s181, 8
      %s183 = scalar_lea.vmem %s1, %s182
      %p184 = scmp.lt.s32.totalorder %s17, 1
      %s185 = scalar_select %p184, %s17, 1
      %p186 = scmp.lt.s32.totalorder %s18, 0
      %s187 = scalar_select %p186, %s18, 0
      %s188 = smul.addr %s185, 32
      %s189 = sadd.s32 %s187, %s188
      %s190 = smul.addr %s189, 8
      %s191 = scalar_lea.vmem %s2, %s190
      %vm192 = vcmask 31744
      %193 = vst.msk [vmem:[#allocation2] sm:$0xff] %vm192, 0.0
      %194 = vst.msk [vmem:[#allocation2 + $0x8] sm:$0xff] %vm192, 0.0
      %vm195 = vcmask 25600
      %196 = vst.msk [vmem:[#allocation2 + $0x10] sm:$0x3] %vm195, 0.0
      %s197 = scalar_lea.vmem [#allocation2], 408
      %198 = vst.msk [vmem:[%s197] sm:$0xff] %vm192, 0.0
      %199 = vst.msk [vmem:[%s197 + $0x8] sm:$0xff] %vm192, 0.0
      %200 = vst.msk [vmem:[%s197 + $0x10] sm:$0x3] %vm195, 0.0
      %vm201 = vcmask 24576
      %202 = vst.msk [vmem:[#allocation2] sm:$0x1] %vm201, 0.0
      %203 = vst.msk [vmem:[#allocation2 + $0x18] sm:$0x1] %vm201, 0.0
      %204 = vst.msk [vmem:[#allocation2 + $0x30] sm:$0x1] %vm201, 0.0
      %205 = vst.msk [vmem:[#allocation2 + $0x48] sm:$0x1] %vm201, 0.0
      %206 = vst.msk [vmem:[#allocation2 + $0x60] sm:$0x1] %vm201, 0.0
      %207 = vst.msk [vmem:[#allocation2 + $0x78] sm:$0x1] %vm201, 0.0
      %208 = vst.msk [vmem:[#allocation2 + $0x90] sm:$0x1] %vm201, 0.0
      %209 = vst.msk [vmem:[#allocation2 + $0xa8] sm:$0x1] %vm201, 0.0
      %210 = vst.msk [vmem:[#allocation2 + $0xc0] sm:$0x1] %vm201, 0.0
      %211 = vst.msk [vmem:[#allocation2 + $0xd8] sm:$0x1] %vm201, 0.0
      %212 = vst.msk [vmem:[#allocation2 + $0xf0] sm:$0x1] %vm201, 0.0
      %213 = vst.msk [vmem:[#allocation2 + $0x108] sm:$0x1] %vm201, 0.0
      %214 = vst.msk [vmem:[#allocation2 + $0x120] sm:$0x1] %vm201, 0.0
      %215 = vst.msk [vmem:[#allocation2 + $0x138] sm:$0x1] %vm201, 0.0
      %216 = vst.msk [vmem:[#allocation2 + $0x150] sm:$0x1] %vm201, 0.0
      %217 = vst.msk [vmem:[#allocation2 + $0x168] sm:$0x1] %vm201, 0.0
      %218 = vst.msk [vmem:[#allocation2 + $0x180] sm:$0x1] %vm201, 0.0
      %219 = vst.msk [vmem:[#allocation2 + $0x198] sm:$0x1] %vm201, 0.0
      %220 = vst.msk [vmem:[#allocation2 + $0x11] sm:$0x1] %vm201, 0.0
      %221 = vst.msk [vmem:[#allocation2 + $0x29] sm:$0x1] %vm201, 0.0
      %222 = vst.msk [vmem:[#allocation2 + $0x41] sm:$0x1] %vm201, 0.0
      %223 = vst.msk [vmem:[#allocation2 + $0x59] sm:$0x1] %vm201, 0.0
      %224 = vst.msk [vmem:[#allocation2 + $0x71] sm:$0x1] %vm201, 0.0
      %225 = vst.msk [vmem:[#allocation2 + $0x89] sm:$0x1] %vm201, 0.0
      %226 = vst.msk [vmem:[#allocation2 + $0xa1] sm:$0x1] %vm201, 0.0
      %227 = vst.msk [vmem:[#allocation2 + $0xb9] sm:$0x1] %vm201, 0.0
      %228 = vst.msk [vmem:[#allocation2 + $0xd1] sm:$0x1] %vm201, 0.0
      %229 = vst.msk [vmem:[#allocation2 + $0xe9] sm:$0x1] %vm201, 0.0
      %230 = vst.msk [vmem:[#allocation2 + $0x101] sm:$0x1] %vm201, 0.0
      %231 = vst.msk [vmem:[#allocation2 + $0x119] sm:$0x1] %vm201, 0.0
      %232 = vst.msk [vmem:[#allocation2 + $0x131] sm:$0x1] %vm201, 0.0
      %233 = vst.msk [vmem:[#allocation2 + $0x149] sm:$0x1] %vm201, 0.0
      %234 = vst.msk [vmem:[#allocation2 + $0x161] sm:$0x1] %vm201, 0.0
      %235 = vst.msk [vmem:[#allocation2 + $0x179] sm:$0x1] %vm201, 0.0
      %236 = vst.msk [vmem:[#allocation2 + $0x191] sm:$0x1] %vm201, 0.0
      %237 = vst.msk [vmem:[#allocation2 + $0x1a9] sm:$0x1] %vm201, 0.0
      %v238 = vld [vmem:[%s179] sm:$0xff]
      %v239 = vld [vmem:[%s179 + $0x8] sm:$0xff]
      %v240 = vld [vmem:[%s179 + $0x10] sm:$0xff]
      %v241 = vld [vmem:[%s179 + $0x18] sm:$0xff]
      %v242 = vld [vmem:[%s179 + $0x20] sm:$0xff]
      %v243 = vld [vmem:[%s179 + $0x28] sm:$0xff]
      %v244 = vld [vmem:[%s179 + $0x30] sm:$0xff]
      %v245 = vld [vmem:[%s179 + $0x38] sm:$0xff]
      %v246 = vld [vmem:[%s179 + $0x40] sm:$0xff]
      %v247 = vld [vmem:[%s179 + $0x48] sm:$0xff]
      %v248 = vld [vmem:[%s179 + $0x50] sm:$0xff]
      %v249 = vld [vmem:[%s179 + $0x58] sm:$0xff]
      %v250 = vld [vmem:[%s179 + $0x60] sm:$0xff]
      %v251 = vld [vmem:[%s179 + $0x68] sm:$0xff]
      %v252 = vld [vmem:[%s179 + $0x70] sm:$0xff]
      %v253 = vld [vmem:[%s179 + $0x78] sm:$0xff]
      %v254 = vld [vmem:[%s179 + $0x80] sm:$0xff]
      %v255 = vld [vmem:[%s179 + $0x88] sm:$0xff]
      %v256 = vld [vmem:[%s179 + $0x90] sm:$0xff]
      %v257 = vld [vmem:[%s179 + $0x98] sm:$0xff]
      %v258 = vld [vmem:[%s179 + $0xa0] sm:$0xff]
      %v259 = vld [vmem:[%s179 + $0xa8] sm:$0xff]
      %v260 = vld [vmem:[%s179 + $0xb0] sm:$0xff]
      %v261 = vld [vmem:[%s179 + $0xb8] sm:$0xff]
      %v262 = vld [vmem:[%s179 + $0xc0] sm:$0xff]
      %v263 = vld [vmem:[%s179 + $0xc8] sm:$0xff]
      %v264 = vld [vmem:[%s179 + $0xd0] sm:$0xff]
      %v265 = vld [vmem:[%s179 + $0xd8] sm:$0xff]
      %v266 = vld [vmem:[%s179 + $0xe0] sm:$0xff]
      %v267 = vld [vmem:[%s179 + $0xe8] sm:$0xff]
      %v268 = vld [vmem:[%s179 + $0xf0] sm:$0xff]
      %v269 = vld [vmem:[%s179 + $0xf8] sm:$0xff]
      %s270 = scalar_lea.vmem [#allocation2], 24
      %271 = vst.msk [vmem:[%s270 + $0x1] sm:$0xff] %vm192, %v238
      %272 = vst.msk [vmem:[%s270 + $0x9] sm:$0xff] %vm192, %v239
      %273 = vst.msk [vmem:[%s270 + $0x19] sm:$0xff] %vm192, %v240
      %274 = vst.msk [vmem:[%s270 + $0x21] sm:$0xff] %vm192, %v241
      %275 = vst.msk [vmem:[%s270 + $0x31] sm:$0xff] %vm192, %v242
      %276 = vst.msk [vmem:[%s270 + $0x39] sm:$0xff] %vm192, %v243
      %277 = vst.msk [vmem:[%s270 + $0x49] sm:$0xff] %vm192, %v244
      %278 = vst.msk [vmem:[%s270 + $0x51] sm:$0xff] %vm192, %v245
      %279 = vst.msk [vmem:[%s270 + $0x61] sm:$0xff] %vm192, %v246
      %280 = vst.msk [vmem:[%s270 + $0x69] sm:$0xff] %vm192, %v247
      %281 = vst.msk [vmem:[%s270 + $0x79] sm:$0xff] %vm192, %v248
      %282 = vst.msk [vmem:[%s270 + $0x81] sm:$0xff] %vm192, %v249
      %283 = vst.msk [vmem:[%s270 + $0x91] sm:$0xff] %vm192, %v250
      %284 = vst.msk [vmem:[%s270 + $0x99] sm:$0xff] %vm192, %v251
      %285 = vst.msk [vmem:[%s270 + $0xa9] sm:$0xff] %vm192, %v252
      %286 = vst.msk [vmem:[%s270 + $0xb1] sm:$0xff] %vm192, %v253
      %287 = vst.msk [vmem:[%s270 + $0xc1] sm:$0xff] %vm192, %v254
      %288 = vst.msk [vmem:[%s270 + $0xc9] sm:$0xff] %vm192, %v255
      %289 = vst.msk [vmem:[%s270 + $0xd9] sm:$0xff] %vm192, %v256
      %290 = vst.msk [vmem:[%s270 + $0xe1] sm:$0xff] %vm192, %v257
      %291 = vst.msk [vmem:[%s270 + $0xf1] sm:$0xff] %vm192, %v258
      %292 = vst.msk [vmem:[%s270 + $0xf9] sm:$0xff] %vm192, %v259
      %293 = vst.msk [vmem:[%s270 + $0x109] sm:$0xff] %vm192, %v260
      %294 = vst.msk [vmem:[%s270 + $0x111] sm:$0xff] %vm192, %v261
      %295 = vst.msk [vmem:[%s270 + $0x121] sm:$0xff] %vm192, %v262
      %296 = vst.msk [vmem:[%s270 + $0x129] sm:$0xff] %vm192, %v263
      %297 = vst.msk [vmem:[%s270 + $0x139] sm:$0xff] %vm192, %v264
      %298 = vst.msk [vmem:[%s270 + $0x141] sm:$0xff] %vm192, %v265
      %299 = vst.msk [vmem:[%s270 + $0x151] sm:$0xff] %vm192, %v266
      %300 = vst.msk [vmem:[%s270 + $0x159] sm:$0xff] %vm192, %v267
      %301 = vst.msk [vmem:[%s270 + $0x169] sm:$0xff] %vm192, %v268
      %302 = vst.msk [vmem:[%s270 + $0x171] sm:$0xff] %vm192, %v269
      %v303 = vld [vmem:[%s183] sm:$0x1]
      %v304 = vld [vmem:[#allocation2] sm:$0xff]
      %v305 = vld [vmem:[#allocation2 + $0x8] sm:$0xff]
      %v306 = vld [vmem:[#allocation2 + $0x18] sm:$0xff]
      %v307 = vld [vmem:[#allocation2 + $0x20] sm:$0xff]
      %v308 = vld [vmem:[#allocation2 + $0x30] sm:$0xff]
      %v309 = vld [vmem:[#allocation2 + $0x38] sm:$0xff]
      %v310 = vld [vmem:[#allocation2 + $0x48] sm:$0xff]
      %v311 = vld [vmem:[#allocation2 + $0x50] sm:$0xff]
      %v312 = vld [vmem:[#allocation2 + $0x60] sm:$0xff]
      %v313 = vld [vmem:[#allocation2 + $0x68] sm:$0xff]
      %v314 = vld [vmem:[#allocation2 + $0x78] sm:$0xff]
      %v315 = vld [vmem:[#allocation2 + $0x80] sm:$0xff]
      %v316 = vld [vmem:[#allocation2 + $0x90] sm:$0xff]
      %v317 = vld [vmem:[#allocation2 + $0x98] sm:$0xff]
      %v318 = vld [vmem:[#allocation2 + $0xa8] sm:$0xff]
      %v319 = vld [vmem:[#allocation2 + $0xb0] sm:$0xff]
      %v320 = vlaneseq
      %v321 = vshrl.u32 %v320, 7
      %v322 = vsub.s32 0, %v321
      %v323 = vrot.slane %v303, %v322
      %v324 = vmul.f32 %v304, %v323
      %v325 = vmul.f32 %v305, %v323
      %v326 = vmul.f32 %v306, %v323
      %v327 = vmul.f32 %v307, %v323
      %v328 = vmul.f32 %v308, %v323
      %v329 = vmul.f32 %v309, %v323
      %v330 = vmul.f32 %v310, %v323
      %v331 = vmul.f32 %v311, %v323
      %v332 = vmul.f32 %v312, %v323
      %v333 = vmul.f32 %v313, %v323
      %v334 = vmul.f32 %v314, %v323
      %v335 = vmul.f32 %v315, %v323
      %v336 = vmul.f32 %v316, %v323
      %v337 = vmul.f32 %v317, %v323
      %v338 = vmul.f32 %v318, %v323
      %v339 = vmul.f32 %v319, %v323
      %v340 = vld [vmem:[%s183 + $0x1] sm:$0x1]
      %v341 = vld [vmem:[#allocation2 + $0x1] sm:$0xff]
      %v342 = vld [vmem:[#allocation2 + $0x9] sm:$0xff]
      %v343 = vld [vmem:[#allocation2 + $0x19] sm:$0xff]
      %v344 = vld [vmem:[#allocation2 + $0x21] sm:$0xff]
      %v345 = vld [vmem:[#allocation2 + $0x31] sm:$0xff]
      %v346 = vld [vmem:[#allocation2 + $0x39] sm:$0xff]
      %v347 = vld [vmem:[#allocation2 + $0x49] sm:$0xff]
      %v348 = vld [vmem:[#allocation2 + $0x51] sm:$0xff]
      %v349 = vld [vmem:[#allocation2 + $0x61] sm:$0xff]
      %v350 = vld [vmem:[#allocation2 + $0x69] sm:$0xff]
      %v351 = vld [vmem:[#allocation2 + $0x79] sm:$0xff]
      %v352 = vld [vmem:[#allocation2 + $0x81] sm:$0xff]
      %v353 = vld [vmem:[#allocation2 + $0x91] sm:$0xff]
      %v354 = vld [vmem:[#allocation2 + $0x99] sm:$0xff]
      %v355 = vld [vmem:[#allocation2 + $0xa9] sm:$0xff]
      %v356 = vld [vmem:[#allocation2 + $0xb1] sm:$0xff]
      %v357 = vlaneseq
      %v358 = vshrl.u32 %v357, 7
      %v359 = vsub.s32 0, %v358
      %v360 = vrot.slane %v340, %v359
      %v361 = vmul.f32 %v341, %v360
      %v362 = vmul.f32 %v342, %v360
      %v363 = vmul.f32 %v343, %v360
      %v364 = vmul.f32 %v344, %v360
      %v365 = vmul.f32 %v345, %v360
      %v366 = vmul.f32 %v346, %v360
      %v367 = vmul.f32 %v347, %v360
      %v368 = vmul.f32 %v348, %v360
      %v369 = vmul.f32 %v349, %v360
      %v370 = vmul.f32 %v350, %v360
      %v371 = vmul.f32 %v351, %v360
      %v372 = vmul.f32 %v352, %v360
      %v373 = vmul.f32 %v353, %v360
      %v374 = vmul.f32 %v354, %v360
      %v375 = vmul.f32 %v355, %v360
      %v376 = vmul.f32 %v356, %v360
      %v377 = vadd.f32 %v324, %v361
      %v378 = vadd.f32 %v325, %v362
      %v379 = vadd.f32 %v326, %v363
      %v380 = vadd.f32 %v327, %v364
      %v381 = vadd.f32 %v328, %v365
      %v382 = vadd.f32 %v329, %v366
      %v383 = vadd.f32 %v330, %v367
      %v384 = vadd.f32 %v331, %v368
      %v385 = vadd.f32 %v332, %v369
      %v386 = vadd.f32 %v333, %v370
      %v387 = vadd.f32 %v334, %v371
      %v388 = vadd.f32 %v335, %v372
      %v389 = vadd.f32 %v336, %v373
      %v390 = vadd.f32 %v337, %v374
      %v391 = vadd.f32 %v338, %v375
      %v392 = vadd.f32 %v339, %v376
      %v393 = vld [vmem:[%s183 + $0x2] sm:$0x1]
      %v394 = vld [vmem:[#allocation2 + $0x2] sm:$0xff]
      %v395 = vld [vmem:[#allocation2 + $0xa] sm:$0xff]
      %v396 = vld [vmem:[#allocation2 + $0x1a] sm:$0xff]
      %v397 = vld [vmem:[#allocation2 + $0x22] sm:$0xff]
      %v398 = vld [vmem:[#allocation2 + $0x32] sm:$0xff]
      %v399 = vld [vmem:[#allocation2 + $0x3a] sm:$0xff]
      %v400 = vld [vmem:[#allocation2 + $0x4a] sm:$0xff]
      %v401 = vld [vmem:[#allocation2 + $0x52] sm:$0xff]
      %v402 = vld [vmem:[#allocation2 + $0x62] sm:$0xff]
      %v403 = vld [vmem:[#allocation2 + $0x6a] sm:$0xff]
      %v404 = vld [vmem:[#allocation2 + $0x7a] sm:$0xff]
      %v405 = vld [vmem:[#allocation2 + $0x82] sm:$0xff]
      %v406 = vld [vmem:[#allocation2 + $0x92] sm:$0xff]
      %v407 = vld [vmem:[#allocation2 + $0x9a] sm:$0xff]
      %v408 = vld [vmem:[#allocation2 + $0xaa] sm:$0xff]
      %v409 = vld [vmem:[#allocation2 + $0xb2] sm:$0xff]
      %v410 = vlaneseq
      %v411 = vshrl.u32 %v410, 7
      %v412 = vsub.s32 0, %v411
      %v413 = vrot.slane %v393, %v412
      %v414 = vmul.f32 %v394, %v413
      %v415 = vmul.f32 %v395, %v413
      %v416 = vmul.f32 %v396, %v413
      %v417 = vmul.f32 %v397, %v413
      %v418 = vmul.f32 %v398, %v413
      %v419 = vmul.f32 %v399, %v413
      %v420 = vmul.f32 %v400, %v413
      %v421 = vmul.f32 %v401, %v413
      %v422 = vmul.f32 %v402, %v413
      %v423 = vmul.f32 %v403, %v413
      %v424 = vmul.f32 %v404, %v413
      %v425 = vmul.f32 %v405, %v413
      %v426 = vmul.f32 %v406, %v413
      %v427 = vmul.f32 %v407, %v413
      %v428 = vmul.f32 %v408, %v413
      %v429 = vmul.f32 %v409, %v413
      %v430 = vadd.f32 %v377, %v414
      %v431 = vadd.f32 %v378, %v415
      %v432 = vadd.f32 %v379, %v416
      %v433 = vadd.f32 %v380, %v417
      %v434 = vadd.f32 %v381, %v418
      %v435 = vadd.f32 %v382, %v419
      %v436 = vadd.f32 %v383, %v420
      %v437 = vadd.f32 %v384, %v421
      %v438 = vadd.f32 %v385, %v422
      %v439 = vadd.f32 %v386, %v423
      %v440 = vadd.f32 %v387, %v424
      %v441 = vadd.f32 %v388, %v425
      %v442 = vadd.f32 %v389, %v426
      %v443 = vadd.f32 %v390, %v427
      %v444 = vadd.f32 %v391, %v428
      %v445 = vadd.f32 %v392, %v429
      %v446 = vld [vmem:[%s183 + $0x3] sm:$0x1]
      %v447 = vld [vmem:[%s270] sm:$0xff]
      %v448 = vld [vmem:[%s270 + $0x8] sm:$0xff]
      %v449 = vld [vmem:[%s270 + $0x18] sm:$0xff]
      %v450 = vld [vmem:[%s270 + $0x20] sm:$0xff]
      %v451 = vld [vmem:[%s270 + $0x30] sm:$0xff]
      %v452 = vld [vmem:[%s270 + $0x38] sm:$0xff]
      %v453 = vld [vmem:[%s270 + $0x48] sm:$0xff]
      %v454 = vld [vmem:[%s270 + $0x50] sm:$0xff]
      %v455 = vld [vmem:[%s270 + $0x60] sm:$0xff]
      %v456 = vld [vmem:[%s270 + $0x68] sm:$0xff]
      %v457 = vld [vmem:[%s270 + $0x78] sm:$0xff]
      %v458 = vld [vmem:[%s270 + $0x80] sm:$0xff]
      %v459 = vld [vmem:[%s270 + $0x90] sm:$0xff]
      %v460 = vld [vmem:[%s270 + $0x98] sm:$0xff]
      %v461 = vld [vmem:[%s270 + $0xa8] sm:$0xff]
      %v462 = vld [vmem:[%s270 + $0xb0] sm:$0xff]
      %v463 = vlaneseq
      %v464 = vshrl.u32 %v463, 7
      %v465 = vsub.s32 0, %v464
      %v466 = vrot.slane %v446, %v465
      %v467 = vmul.f32 %v447, %v466
      %v468 = vmul.f32 %v448, %v466
      %v469 = vmul.f32 %v449, %v466
      %v470 = vmul.f32 %v450, %v466
      %v471 = vmul.f32 %v451, %v466
      %v472 = vmul.f32 %v452, %v466
      %v473 = vmul.f32 %v453, %v466
      %v474 = vmul.f32 %v454, %v466
      %v475 = vmul.f32 %v455, %v466
      %v476 = vmul.f32 %v456, %v466
      %v477 = vmul.f32 %v457, %v466
      %v478 = vmul.f32 %v458, %v466
      %v479 = vmul.f32 %v459, %v466
      %v480 = vmul.f32 %v460, %v466
      %v481 = vmul.f32 %v461, %v466
      %v482 = vmul.f32 %v462, %v466
      %v483 = vadd.f32 %v430, %v467
      %v484 = vadd.f32 %v431, %v468
      %v485 = vadd.f32 %v432, %v469
      %v486 = vadd.f32 %v433, %v470
      %v487 = vadd.f32 %v434, %v471
      %v488 = vadd.f32 %v435, %v472
      %v489 = vadd.f32 %v436, %v473
      %v490 = vadd.f32 %v437, %v474
      %v491 = vadd.f32 %v438, %v475
      %v492 = vadd.f32 %v439, %v476
      %v493 = vadd.f32 %v440, %v477
      %v494 = vadd.f32 %v441, %v478
      %v495 = vadd.f32 %v442, %v479
      %v496 = vadd.f32 %v443, %v480
      %v497 = vadd.f32 %v444, %v481
      %v498 = vadd.f32 %v445, %v482
      %v499 = vld [vmem:[%s183 + $0x4] sm:$0x1]
      %v500 = vld [vmem:[%s270 + $0x1] sm:$0xff]
      %v501 = vld [vmem:[%s270 + $0x9] sm:$0xff]
      %v502 = vld [vmem:[%s270 + $0x19] sm:$0xff]
      %v503 = vld [vmem:[%s270 + $0x21] sm:$0xff]
      %v504 = vld [vmem:[%s270 + $0x31] sm:$0xff]
      %v505 = vld [vmem:[%s270 + $0x39] sm:$0xff]
      %v506 = vld [vmem:[%s270 + $0x49] sm:$0xff]
      %v507 = vld [vmem:[%s270 + $0x51] sm:$0xff]
      %v508 = vld [vmem:[%s270 + $0x61] sm:$0xff]
      %v509 = vld [vmem:[%s270 + $0x69] sm:$0xff]
      %v510 = vld [vmem:[%s270 + $0x79] sm:$0xff]
      %v511 = vld [vmem:[%s270 + $0x81] sm:$0xff]
      %v512 = vld [vmem:[%s270 + $0x91] sm:$0xff]
      %v513 = vld [vmem:[%s270 + $0x99] sm:$0xff]
      %v514 = vld [vmem:[%s270 + $0xa9] sm:$0xff]
      %v515 = vld [vmem:[%s270 + $0xb1] sm:$0xff]
      %v516 = vlaneseq
      %v517 = vshrl.u32 %v516, 7
      %v518 = vsub.s32 0, %v517
      %v519 = vrot.slane %v499, %v518
      %v520 = vmul.f32 %v500, %v519
      %v521 = vmul.f32 %v501, %v519
      %v522 = vmul.f32 %v502, %v519
      %v523 = vmul.f32 %v503, %v519
      %v524 = vmul.f32 %v504, %v519
      %v525 = vmul.f32 %v505, %v519
      %v526 = vmul.f32 %v506, %v519
      %v527 = vmul.f32 %v507, %v519
      %v528 = vmul.f32 %v508, %v519
      %v529 = vmul.f32 %v509, %v519
      %v530 = vmul.f32 %v510, %v519
      %v531 = vmul.f32 %v511, %v519
      %v532 = vmul.f32 %v512, %v519
      %v533 = vmul.f32 %v513, %v519
      %v534 = vmul.f32 %v514, %v519
      %v535 = vmul.f32 %v515, %v519
      %v536 = vadd.f32 %v483, %v520
      %v537 = vadd.f32 %v484, %v521
      %v538 = vadd.f32 %v485, %v522
      %v539 = vadd.f32 %v486, %v523
      %v540 = vadd.f32 %v487, %v524
      %v541 = vadd.f32 %v488, %v525
      %v542 = vadd.f32 %v489, %v526
      %v543 = vadd.f32 %v490, %v527
      %v544 = vadd.f32 %v491, %v528
      %v545 = vadd.f32 %v492, %v529
      %v546 = vadd.f32 %v493, %v530
      %v547 = vadd.f32 %v494, %v531
      %v548 = vadd.f32 %v495, %v532
      %v549 = vadd.f32 %v496, %v533
      %v550 = vadd.f32 %v497, %v534
      %v551 = vadd.f32 %v498, %v535
      %v552 = vld [vmem:[%s183 + $0x5] sm:$0x1]
      %v553 = vld [vmem:[%s270 + $0x2] sm:$0xff]
      %v554 = vld [vmem:[%s270 + $0xa] sm:$0xff]
      %v555 = vld [vmem:[%s270 + $0x1a] sm:$0xff]
      %v556 = vld [vmem:[%s270 + $0x22] sm:$0xff]
      %v557 = vld [vmem:[%s270 + $0x32] sm:$0xff]
      %v558 = vld [vmem:[%s270 + $0x3a] sm:$0xff]
      %v559 = vld [vmem:[%s270 + $0x4a] sm:$0xff]
      %v560 = vld [vmem:[%s270 + $0x52] sm:$0xff]
      %v561 = vld [vmem:[%s270 + $0x62] sm:$0xff]
      %v562 = vld [vmem:[%s270 + $0x6a] sm:$0xff]
      %v563 = vld [vmem:[%s270 + $0x7a] sm:$0xff]
      %v564 = vld [vmem:[%s270 + $0x82] sm:$0xff]
      %v565 = vld [vmem:[%s270 + $0x92] sm:$0xff]
      %v566 = vld [vmem:[%s270 + $0x9a] sm:$0xff]
      %v567 = vld [vmem:[%s270 + $0xaa] sm:$0xff]
      %v568 = vld [vmem:[%s270 + $0xb2] sm:$0xff]
      %v569 = vlaneseq
      %v570 = vshrl.u32 %v569, 7
      %v571 = vsub.s32 0, %v570
      %v572 = vrot.slane %v552, %v571
      %v573 = vmul.f32 %v553, %v572
      %v574 = vmul.f32 %v554, %v572
      %v575 = vmul.f32 %v555, %v572
      %v576 = vmul.f32 %v556, %v572
      %v577 = vmul.f32 %v557, %v572
      %v578 = vmul.f32 %v558, %v572
      %v579 = vmul.f32 %v559, %v572
      %v580 = vmul.f32 %v560, %v572
      %v581 = vmul.f32 %v561, %v572
      %v582 = vmul.f32 %v562, %v572
      %v583 = vmul.f32 %v563, %v572
      %v584 = vmul.f32 %v564, %v572
      %v585 = vmul.f32 %v565, %v572
      %v586 = vmul.f32 %v566, %v572
      %v587 = vmul.f32 %v567, %v572
      %v588 = vmul.f32 %v568, %v572
      %v589 = vadd.f32 %v536, %v573
      %v590 = vadd.f32 %v537, %v574
      %v591 = vadd.f32 %v538, %v575
      %v592 = vadd.f32 %v539, %v576
      %v593 = vadd.f32 %v540, %v577
      %v594 = vadd.f32 %v541, %v578
      %v595 = vadd.f32 %v542, %v579
      %v596 = vadd.f32 %v543, %v580
      %v597 = vadd.f32 %v544, %v581
      %v598 = vadd.f32 %v545, %v582
      %v599 = vadd.f32 %v546, %v583
      %v600 = vadd.f32 %v547, %v584
      %v601 = vadd.f32 %v548, %v585
      %v602 = vadd.f32 %v549, %v586
      %v603 = vadd.f32 %v550, %v587
      %v604 = vadd.f32 %v551, %v588
      %v605 = vld [vmem:[%s183 + $0x6] sm:$0x1]
      %s606 = scalar_lea.vmem [#allocation2], 48
      %v607 = vld [vmem:[%s606] sm:$0xff]
      %v608 = vld [vmem:[%s606 + $0x8] sm:$0xff]
      %v609 = vld [vmem:[%s606 + $0x18] sm:$0xff]
      %v610 = vld [vmem:[%s606 + $0x20] sm:$0xff]
      %v611 = vld [vmem:[%s606 + $0x30] sm:$0xff]
      %v612 = vld [vmem:[%s606 + $0x38] sm:$0xff]
      %v613 = vld [vmem:[%s606 + $0x48] sm:$0xff]
      %v614 = vld [vmem:[%s606 + $0x50] sm:$0xff]
      %v615 = vld [vmem:[%s606 + $0x60] sm:$0xff]
      %v616 = vld [vmem:[%s606 + $0x68] sm:$0xff]
      %v617 = vld [vmem:[%s606 + $0x78] sm:$0xff]
      %v618 = vld [vmem:[%s606 + $0x80] sm:$0xff]
      %v619 = vld [vmem:[%s606 + $0x90] sm:$0xff]
      %v620 = vld [vmem:[%s606 + $0x98] sm:$0xff]
      %v621 = vld [vmem:[%s606 + $0xa8] sm:$0xff]
      %v622 = vld [vmem:[%s606 + $0xb0] sm:$0xff]
      %v623 = vlaneseq
      %v624 = vshrl.u32 %v623, 7
      %v625 = vsub.s32 0, %v624
      %v626 = vrot.slane %v605, %v625
      %v627 = vmul.f32 %v607, %v626
      %v628 = vmul.f32 %v608, %v626
      %v629 = vmul.f32 %v609, %v626
      %v630 = vmul.f32 %v610, %v626
      %v631 = vmul.f32 %v611, %v626
      %v632 = vmul.f32 %v612, %v626
      %v633 = vmul.f32 %v613, %v626
      %v634 = vmul.f32 %v614, %v626
      %v635 = vmul.f32 %v615, %v626
      %v636 = vmul.f32 %v616, %v626
      %v637 = vmul.f32 %v617, %v626
      %v638 = vmul.f32 %v618, %v626
      %v639 = vmul.f32 %v619, %v626
      %v640 = vmul.f32 %v620, %v626
      %v641 = vmul.f32 %v621, %v626
      %v642 = vmul.f32 %v622, %v626
      %v643 = vadd.f32 %v589, %v627
      %v644 = vadd.f32 %v590, %v628
      %v645 = vadd.f32 %v591, %v629
      %v646 = vadd.f32 %v592, %v630
      %v647 = vadd.f32 %v593, %v631
      %v648 = vadd.f32 %v594, %v632
      %v649 = vadd.f32 %v595, %v633
      %v650 = vadd.f32 %v596, %v634
      %v651 = vadd.f32 %v597, %v635
      %v652 = vadd.f32 %v598, %v636
      %v653 = vadd.f32 %v599, %v637
      %v654 = vadd.f32 %v600, %v638
      %v655 = vadd.f32 %v601, %v639
      %v656 = vadd.f32 %v602, %v640
      %v657 = vadd.f32 %v603, %v641
      %v658 = vadd.f32 %v604, %v642
      %v659 = vld [vmem:[%s183 + $0x7] sm:$0x1]
      %v660 = vld [vmem:[%s606 + $0x1] sm:$0xff]
      %v661 = vld [vmem:[%s606 + $0x9] sm:$0xff]
      %v662 = vld [vmem:[%s606 + $0x19] sm:$0xff]
      %v663 = vld [vmem:[%s606 + $0x21] sm:$0xff]
      %v664 = vld [vmem:[%s606 + $0x31] sm:$0xff]
      %v665 = vld [vmem:[%s606 + $0x39] sm:$0xff]
      %v666 = vld [vmem:[%s606 + $0x49] sm:$0xff]
      %v667 = vld [vmem:[%s606 + $0x51] sm:$0xff]
      %v668 = vld [vmem:[%s606 + $0x61] sm:$0xff]
      %v669 = vld [vmem:[%s606 + $0x69] sm:$0xff]
      %v670 = vld [vmem:[%s606 + $0x79] sm:$0xff]
      %v671 = vld [vmem:[%s606 + $0x81] sm:$0xff]
      %v672 = vld [vmem:[%s606 + $0x91] sm:$0xff]
      %v673 = vld [vmem:[%s606 + $0x99] sm:$0xff]
      %v674 = vld [vmem:[%s606 + $0xa9] sm:$0xff]
      %v675 = vld [vmem:[%s606 + $0xb1] sm:$0xff]
      %v676 = vlaneseq
      %v677 = vshrl.u32 %v676, 7
      %v678 = vsub.s32 0, %v677
      %v679 = vrot.slane %v659, %v678
      %v680 = vmul.f32 %v660, %v679
      %v681 = vmul.f32 %v661, %v679
      %v682 = vmul.f32 %v662, %v679
      %v683 = vmul.f32 %v663, %v679
      %v684 = vmul.f32 %v664, %v679
      %v685 = vmul.f32 %v665, %v679
      %v686 = vmul.f32 %v666, %v679
      %v687 = vmul.f32 %v667, %v679
      %v688 = vmul.f32 %v668, %v679
      %v689 = vmul.f32 %v669, %v679
      %v690 = vmul.f32 %v670, %v679
      %v691 = vmul.f32 %v671, %v679
      %v692 = vmul.f32 %v672, %v679
      %v693 = vmul.f32 %v673, %v679
      %v694 = vmul.f32 %v674, %v679
      %v695 = vmul.f32 %v675, %v679
      %v696 = vadd.f32 %v643, %v680
      %v697 = vadd.f32 %v644, %v681
      %v698 = vadd.f32 %v645, %v682
      %v699 = vadd.f32 %v646, %v683
      %v700 = vadd.f32 %v647, %v684
      %v701 = vadd.f32 %v648, %v685
      %v702 = vadd.f32 %v649, %v686
      %v703 = vadd.f32 %v650, %v687
      %v704 = vadd.f32 %v651, %v688
      %v705 = vadd.f32 %v652, %v689
      %v706 = vadd.f32 %v653, %v690
      %v707 = vadd.f32 %v654, %v691
      %v708 = vadd.f32 %v655, %v692
      %v709 = vadd.f32 %v656, %v693
      %v710 = vadd.f32 %v657, %v694
      %v711 = vadd.f32 %v658, %v695
      %v712 = vld [vmem:[%s183 + $0x8] sm:$0x1]
      %v713 = vld [vmem:[%s606 + $0x2] sm:$0xff]
      %v714 = vld [vmem:[%s606 + $0xa] sm:$0xff]
      %v715 = vld [vmem:[%s606 + $0x1a] sm:$0xff]
      %v716 = vld [vmem:[%s606 + $0x22] sm:$0xff]
      %v717 = vld [vmem:[%s606 + $0x32] sm:$0xff]
      %v718 = vld [vmem:[%s606 + $0x3a] sm:$0xff]
      %v719 = vld [vmem:[%s606 + $0x4a] sm:$0xff]
      %v720 = vld [vmem:[%s606 + $0x52] sm:$0xff]
      %v721 = vld [vmem:[%s606 + $0x62] sm:$0xff]
      %v722 = vld [vmem:[%s606 + $0x6a] sm:$0xff]
      %v723 = vld [vmem:[%s606 + $0x7a] sm:$0xff]
      %v724 = vld [vmem:[%s606 + $0x82] sm:$0xff]
      %v725 = vld [vmem:[%s606 + $0x92] sm:$0xff]
      %v726 = vld [vmem:[%s606 + $0x9a] sm:$0xff]
      %v727 = vld [vmem:[%s606 + $0xaa] sm:$0xff]
      %v728 = vld [vmem:[%s606 + $0xb2] sm:$0xff]
      %v729 = vlaneseq
      %v730 = vshrl.u32 %v729, 7
      %v731 = vsub.s32 0, %v730
      %v732 = vrot.slane %v712, %v731
      %v733 = vmul.f32 %v713, %v732
      %v734 = vmul.f32 %v714, %v732
      %v735 = vmul.f32 %v715, %v732
      %v736 = vmul.f32 %v716, %v732
      %v737 = vmul.f32 %v717, %v732
      %v738 = vmul.f32 %v718, %v732
      %v739 = vmul.f32 %v719, %v732
      %v740 = vmul.f32 %v720, %v732
      %v741 = vmul.f32 %v721, %v732
      %v742 = vmul.f32 %v722, %v732
      %v743 = vmul.f32 %v723, %v732
      %v744 = vmul.f32 %v724, %v732
      %v745 = vmul.f32 %v725, %v732
      %v746 = vmul.f32 %v726, %v732
      %v747 = vmul.f32 %v727, %v732
      %v748 = vmul.f32 %v728, %v732
      %v749 = vadd.f32 %v696, %v733
      %v750 = vadd.f32 %v697, %v734
      %v751 = vadd.f32 %v698, %v735
      %v752 = vadd.f32 %v699, %v736
      %v753 = vadd.f32 %v700, %v737
      %v754 = vadd.f32 %v701, %v738
      %v755 = vadd.f32 %v702, %v739
      %v756 = vadd.f32 %v703, %v740
      %v757 = vadd.f32 %v704, %v741
      %v758 = vadd.f32 %v705, %v742
      %v759 = vadd.f32 %v706, %v743
      %v760 = vadd.f32 %v707, %v744
      %v761 = vadd.f32 %v708, %v745
      %v762 = vadd.f32 %v709, %v746
      %v763 = vadd.f32 %v710, %v747
      %v764 = vadd.f32 %v711, %v748
      %765 = vst.msk [vmem:[%s191] sm:$0xff] %vm192, %v749
      %766 = vst.msk [vmem:[%s191 + $0x8] sm:$0xff] %vm192, %v750
      %767 = vst.msk [vmem:[%s191 + $0x10] sm:$0xff] %vm192, %v751
      %768 = vst.msk [vmem:[%s191 + $0x18] sm:$0xff] %vm192, %v752
      %769 = vst.msk [vmem:[%s191 + $0x20] sm:$0xff] %vm192, %v753
      %770 = vst.msk [vmem:[%s191 + $0x28] sm:$0xff] %vm192, %v754
      %771 = vst.msk [vmem:[%s191 + $0x30] sm:$0xff] %vm192, %v755
      %772 = vst.msk [vmem:[%s191 + $0x38] sm:$0xff] %vm192, %v756
      %773 = vst.msk [vmem:[%s191 + $0x40] sm:$0xff] %vm192, %v757
      %774 = vst.msk [vmem:[%s191 + $0x48] sm:$0xff] %vm192, %v758
      %775 = vst.msk [vmem:[%s191 + $0x50] sm:$0xff] %vm192, %v759
      %776 = vst.msk [vmem:[%s191 + $0x58] sm:$0xff] %vm192, %v760
      %777 = vst.msk [vmem:[%s191 + $0x60] sm:$0xff] %vm192, %v761
      %778 = vst.msk [vmem:[%s191 + $0x68] sm:$0xff] %vm192, %v762
      %779 = vst.msk [vmem:[%s191 + $0x70] sm:$0xff] %vm192, %v763
      %780 = vst.msk [vmem:[%s191 + $0x78] sm:$0xff] %vm192, %v764
      %v781 = vld [vmem:[%s183] sm:$0x1]
      %s782 = scalar_lea.vmem [#allocation2], 192
      %v783 = vld [vmem:[%s782] sm:$0xff]
      %v784 = vld [vmem:[%s782 + $0x8] sm:$0xff]
      %v785 = vld [vmem:[%s782 + $0x18] sm:$0xff]
      %v786 = vld [vmem:[%s782 + $0x20] sm:$0xff]
      %v787 = vld [vmem:[%s782 + $0x30] sm:$0xff]
      %v788 = vld [vmem:[%s782 + $0x38] sm:$0xff]
      %v789 = vld [vmem:[%s782 + $0x48] sm:$0xff]
      %v790 = vld [vmem:[%s782 + $0x50] sm:$0xff]
      %v791 = vld [vmem:[%s782 + $0x60] sm:$0xff]
      %v792 = vld [vmem:[%s782 + $0x68] sm:$0xff]
      %v793 = vld [vmem:[%s782 + $0x78] sm:$0xff]
      %v794 = vld [vmem:[%s782 + $0x80] sm:$0xff]
      %v795 = vld [vmem:[%s782 + $0x90] sm:$0xff]
      %v796 = vld [vmem:[%s782 + $0x98] sm:$0xff]
      %v797 = vld [vmem:[%s782 + $0xa8] sm:$0xff]
      %v798 = vld [vmem:[%s782 + $0xb0] sm:$0xff]
      %v799 = vlaneseq
      %v800 = vshrl.u32 %v799, 7
      %v801 = vsub.s32 0, %v800
      %v802 = vrot.slane %v781, %v801
      %v803 = vmul.f32 %v783, %v802
      %v804 = vmul.f32 %v784, %v802
      %v805 = vmul.f32 %v785, %v802
      %v806 = vmul.f32 %v786, %v802
      %v807 = vmul.f32 %v787, %v802
      %v808 = vmul.f32 %v788, %v802
      %v809 = vmul.f32 %v789, %v802
      %v810 = vmul.f32 %v790, %v802
      %v811 = vmul.f32 %v791, %v802
      %v812 = vmul.f32 %v792, %v802
      %v813 = vmul.f32 %v793, %v802
      %v814 = vmul.f32 %v794, %v802
      %v815 = vmul.f32 %v795, %v802
      %v816 = vmul.f32 %v796, %v802
      %v817 = vmul.f32 %v797, %v802
      %v818 = vmul.f32 %v798, %v802
      %v819 = vld [vmem:[%s183 + $0x1] sm:$0x1]
      %v820 = vld [vmem:[%s782 + $0x1] sm:$0xff]
      %v821 = vld [vmem:[%s782 + $0x9] sm:$0xff]
      %v822 = vld [vmem:[%s782 + $0x19] sm:$0xff]
      %v823 = vld [vmem:[%s782 + $0x21] sm:$0xff]
      %v824 = vld [vmem:[%s782 + $0x31] sm:$0xff]
      %v825 = vld [vmem:[%s782 + $0x39] sm:$0xff]
      %v826 = vld [vmem:[%s782 + $0x49] sm:$0xff]
      %v827 = vld [vmem:[%s782 + $0x51] sm:$0xff]
      %v828 = vld [vmem:[%s782 + $0x61] sm:$0xff]
      %v829 = vld [vmem:[%s782 + $0x69] sm:$0xff]
      %v830 = vld [vmem:[%s782 + $0x79] sm:$0xff]
      %v831 = vld [vmem:[%s782 + $0x81] sm:$0xff]
      %v832 = vld [vmem:[%s782 + $0x91] sm:$0xff]
      %v833 = vld [vmem:[%s782 + $0x99] sm:$0xff]
      %v834 = vld [vmem:[%s782 + $0xa9] sm:$0xff]
      %v835 = vld [vmem:[%s782 + $0xb1] sm:$0xff]
      %v836 = vlaneseq
      %v837 = vshrl.u32 %v836, 7
      %v838 = vsub.s32 0, %v837
      %v839 = vrot.slane %v819, %v838
      %v840 = vmul.f32 %v820, %v839
      %v841 = vmul.f32 %v821, %v839
      %v842 = vmul.f32 %v822, %v839
      %v843 = vmul.f32 %v823, %v839
      %v844 = vmul.f32 %v824, %v839
      %v845 = vmul.f32 %v825, %v839
      %v846 = vmul.f32 %v826, %v839
      %v847 = vmul.f32 %v827, %v839
      %v848 = vmul.f32 %v828, %v839
      %v849 = vmul.f32 %v829, %v839
      %v850 = vmul.f32 %v830, %v839
      %v851 = vmul.f32 %v831, %v839
      %v852 = vmul.f32 %v832, %v839
      %v853 = vmul.f32 %v833, %v839
      %v854 = vmul.f32 %v834, %v839
      %v855 = vmul.f32 %v835, %v839
      %v856 = vadd.f32 %v803, %v840
      %v857 = vadd.f32 %v804, %v841
      %v858 = vadd.f32 %v805, %v842
      %v859 = vadd.f32 %v806, %v843
      %v860 = vadd.f32 %v807, %v844
      %v861 = vadd.f32 %v808, %v845
      %v862 = vadd.f32 %v809, %v846
      %v863 = vadd.f32 %v810, %v847
      %v864 = vadd.f32 %v811, %v848
      %v865 = vadd.f32 %v812, %v849
      %v866 = vadd.f32 %v813, %v850
      %v867 = vadd.f32 %v814, %v851
      %v868 = vadd.f32 %v815, %v852
      %v869 = vadd.f32 %v816, %v853
      %v870 = vadd.f32 %v817, %v854
      %v871 = vadd.f32 %v818, %v855
      %v872 = vld [vmem:[%s183 + $0x2] sm:$0x1]
      %v873 = vld [vmem:[%s782 + $0x2] sm:$0xff]
      %v874 = vld [vmem:[%s782 + $0xa] sm:$0xff]
      %v875 = vld [vmem:[%s782 + $0x1a] sm:$0xff]
      %v876 = vld [vmem:[%s782 + $0x22] sm:$0xff]
      %v877 = vld [vmem:[%s782 + $0x32] sm:$0xff]
      %v878 = vld [vmem:[%s782 + $0x3a] sm:$0xff]
      %v879 = vld [vmem:[%s782 + $0x4a] sm:$0xff]
      %v880 = vld [vmem:[%s782 + $0x52] sm:$0xff]
      %v881 = vld [vmem:[%s782 + $0x62] sm:$0xff]
      %v882 = vld [vmem:[%s782 + $0x6a] sm:$0xff]
      %v883 = vld [vmem:[%s782 + $0x7a] sm:$0xff]
      %v884 = vld [vmem:[%s782 + $0x82] sm:$0xff]
      %v885 = vld [vmem:[%s782 + $0x92] sm:$0xff]
      %v886 = vld [vmem:[%s782 + $0x9a] sm:$0xff]
      %v887 = vld [vmem:[%s782 + $0xaa] sm:$0xff]
      %v888 = vld [vmem:[%s782 + $0xb2] sm:$0xff]
      %v889 = vlaneseq
      %v890 = vshrl.u32 %v889, 7
      %v891 = vsub.s32 0, %v890
      %v892 = vrot.slane %v872, %v891
      %v893 = vmul.f32 %v873, %v892
      %v894 = vmul.f32 %v874, %v892
      %v895 = vmul.f32 %v875, %v892
      %v896 = vmul.f32 %v876, %v892
      %v897 = vmul.f32 %v877, %v892
      %v898 = vmul.f32 %v878, %v892
      %v899 = vmul.f32 %v879, %v892
      %v900 = vmul.f32 %v880, %v892
      %v901 = vmul.f32 %v881, %v892
      %v902 = vmul.f32 %v882, %v892
      %v903 = vmul.f32 %v883, %v892
      %v904 = vmul.f32 %v884, %v892
      %v905 = vmul.f32 %v885, %v892
      %v906 = vmul.f32 %v886, %v892
      %v907 = vmul.f32 %v887, %v892
      %v908 = vmul.f32 %v888, %v892
      %v909 = vadd.f32 %v856, %v893
      %v910 = vadd.f32 %v857, %v894
      %v911 = vadd.f32 %v858, %v895
      %v912 = vadd.f32 %v859, %v896
      %v913 = vadd.f32 %v860, %v897
      %v914 = vadd.f32 %v861, %v898
      %v915 = vadd.f32 %v862, %v899
      %v916 = vadd.f32 %v863, %v900
      %v917 = vadd.f32 %v864, %v901
      %v918 = vadd.f32 %v865, %v902
      %v919 = vadd.f32 %v866, %v903
      %v920 = vadd.f32 %v867, %v904
      %v921 = vadd.f32 %v868, %v905
      %v922 = vadd.f32 %v869, %v906
      %v923 = vadd.f32 %v870, %v907
      %v924 = vadd.f32 %v871, %v908
      %v925 = vld [vmem:[%s183 + $0x3] sm:$0x1]
      %s926 = scalar_lea.vmem [#allocation2], 216
      %v927 = vld [vmem:[%s926] sm:$0xff]
      %v928 = vld [vmem:[%s926 + $0x8] sm:$0xff]
      %v929 = vld [vmem:[%s926 + $0x18] sm:$0xff]
      %v930 = vld [vmem:[%s926 + $0x20] sm:$0xff]
      %v931 = vld [vmem:[%s926 + $0x30] sm:$0xff]
      %v932 = vld [vmem:[%s926 + $0x38] sm:$0xff]
      %v933 = vld [vmem:[%s926 + $0x48] sm:$0xff]
      %v934 = vld [vmem:[%s926 + $0x50] sm:$0xff]
      %v935 = vld [vmem:[%s926 + $0x60] sm:$0xff]
      %v936 = vld [vmem:[%s926 + $0x68] sm:$0xff]
      %v937 = vld [vmem:[%s926 + $0x78] sm:$0xff]
      %v938 = vld [vmem:[%s926 + $0x80] sm:$0xff]
      %v939 = vld [vmem:[%s926 + $0x90] sm:$0xff]
      %v940 = vld [vmem:[%s926 + $0x98] sm:$0xff]
      %v941 = vld [vmem:[%s926 + $0xa8] sm:$0xff]
      %v942 = vld [vmem:[%s926 + $0xb0] sm:$0xff]
      %v943 = vlaneseq
      %v944 = vshrl.u32 %v943, 7
      %v945 = vsub.s32 0, %v944
      %v946 = vrot.slane %v925, %v945
      %v947 = vmul.f32 %v927, %v946
      %v948 = vmul.f32 %v928, %v946
      %v949 = vmul.f32 %v929, %v946
      %v950 = vmul.f32 %v930, %v946
      %v951 = vmul.f32 %v931, %v946
      %v952 = vmul.f32 %v932, %v946
      %v953 = vmul.f32 %v933, %v946
      %v954 = vmul.f32 %v934, %v946
      %v955 = vmul.f32 %v935, %v946
      %v956 = vmul.f32 %v936, %v946
      %v957 = vmul.f32 %v937, %v946
      %v958 = vmul.f32 %v938, %v946
      %v959 = vmul.f32 %v939, %v946
      %v960 = vmul.f32 %v940, %v946
      %v961 = vmul.f32 %v941, %v946
      %v962 = vmul.f32 %v942, %v946
      %v963 = vadd.f32 %v909, %v947
      %v964 = vadd.f32 %v910, %v948
      %v965 = vadd.f32 %v911, %v949
      %v966 = vadd.f32 %v912, %v950
      %v967 = vadd.f32 %v913, %v951
      %v968 = vadd.f32 %v914, %v952
      %v969 = vadd.f32 %v915, %v953
      %v970 = vadd.f32 %v916, %v954
      %v971 = vadd.f32 %v917, %v955
      %v972 = vadd.f32 %v918, %v956
      %v973 = vadd.f32 %v919, %v957
      %v974 = vadd.f32 %v920, %v958
      %v975 = vadd.f32 %v921, %v959
      %v976 = vadd.f32 %v922, %v960
      %v977 = vadd.f32 %v923, %v961
      %v978 = vadd.f32 %v924, %v962
      %v979 = vld [vmem:[%s183 + $0x4] sm:$0x1]
      %v980 = vld [vmem:[%s926 + $0x1] sm:$0xff]
      %v981 = vld [vmem:[%s926 + $0x9] sm:$0xff]
      %v982 = vld [vmem:[%s926 + $0x19] sm:$0xff]
      %v983 = vld [vmem:[%s926 + $0x21] sm:$0xff]
      %v984 = vld [vmem:[%s926 + $0x31] sm:$0xff]
      %v985 = vld [vmem:[%s926 + $0x39] sm:$0xff]
      %v986 = vld [vmem:[%s926 + $0x49] sm:$0xff]
      %v987 = vld [vmem:[%s926 + $0x51] sm:$0xff]
      %v988 = vld [vmem:[%s926 + $0x61] sm:$0xff]
      %v989 = vld [vmem:[%s926 + $0x69] sm:$0xff]
      %v990 = vld [vmem:[%s926 + $0x79] sm:$0xff]
      %v991 = vld [vmem:[%s926 + $0x81] sm:$0xff]
      %v992 = vld [vmem:[%s926 + $0x91] sm:$0xff]
      %v993 = vld [vmem:[%s926 + $0x99] sm:$0xff]
      %v994 = vld [vmem:[%s926 + $0xa9] sm:$0xff]
      %v995 = vld [vmem:[%s926 + $0xb1] sm:$0xff]
      %v996 = vlaneseq
      %v997 = vshrl.u32 %v996, 7
      %v998 = vsub.s32 0, %v997
      %v999 = vrot.slane %v979, %v998
      %v1000 = vmul.f32 %v980, %v999
      %v1001 = vmul.f32 %v981, %v999
      %v1002 = vmul.f32 %v982, %v999
      %v1003 = vmul.f32 %v983, %v999
      %v1004 = vmul.f32 %v984, %v999
      %v1005 = vmul.f32 %v985, %v999
      %v1006 = vmul.f32 %v986, %v999
      %v1007 = vmul.f32 %v987, %v999
      %v1008 = vmul.f32 %v988, %v999
      %v1009 = vmul.f32 %v989, %v999
      %v1010 = vmul.f32 %v990, %v999
      %v1011 = vmul.f32 %v991, %v999
      %v1012 = vmul.f32 %v992, %v999
      %v1013 = vmul.f32 %v993, %v999
      %v1014 = vmul.f32 %v994, %v999
      %v1015 = vmul.f32 %v995, %v999
      %v1016 = vadd.f32 %v963, %v1000
      %v1017 = vadd.f32 %v964, %v1001
      %v1018 = vadd.f32 %v965, %v1002
      %v1019 = vadd.f32 %v966, %v1003
      %v1020 = vadd.f32 %v967, %v1004
      %v1021 = vadd.f32 %v968, %v1005
      %v1022 = vadd.f32 %v969, %v1006
      %v1023 = vadd.f32 %v970, %v1007
      %v1024 = vadd.f32 %v971, %v1008
      %v1025 = vadd.f32 %v972, %v1009
      %v1026 = vadd.f32 %v973, %v1010
      %v1027 = vadd.f32 %v974, %v1011
      %v1028 = vadd.f32 %v975, %v1012
      %v1029 = vadd.f32 %v976, %v1013
      %v1030 = vadd.f32 %v977, %v1014
      %v1031 = vadd.f32 %v978, %v1015
      %v1032 = vld [vmem:[%s183 + $0x5] sm:$0x1]
      %v1033 = vld [vmem:[%s926 + $0x2] sm:$0xff]
      %v1034 = vld [vmem:[%s926 + $0xa] sm:$0xff]
      %v1035 = vld [vmem:[%s926 + $0x1a] sm:$0xff]
      %v1036 = vld [vmem:[%s926 + $0x22] sm:$0xff]
      %v1037 = vld [vmem:[%s926 + $0x32] sm:$0xff]
      %v1038 = vld [vmem:[%s926 + $0x3a] sm:$0xff]
      %v1039 = vld [vmem:[%s926 + $0x4a] sm:$0xff]
      %v1040 = vld [vmem:[%s926 + $0x52] sm:$0xff]
      %v1041 = vld [vmem:[%s926 + $0x62] sm:$0xff]
      %v1042 = vld [vmem:[%s926 + $0x6a] sm:$0xff]
      %v1043 = vld [vmem:[%s926 + $0x7a] sm:$0xff]
      %v1044 = vld [vmem:[%s926 + $0x82] sm:$0xff]
      %v1045 = vld [vmem:[%s926 + $0x92] sm:$0xff]
      %v1046 = vld [vmem:[%s926 + $0x9a] sm:$0xff]
      %v1047 = vld [vmem:[%s926 + $0xaa] sm:$0xff]
      %v1048 = vld [vmem:[%s926 + $0xb2] sm:$0xff]
      %v1049 = vlaneseq
      %v1050 = vshrl.u32 %v1049, 7
      %v1051 = vsub.s32 0, %v1050
      %v1052 = vrot.slane %v1032, %v1051
      %v1053 = vmul.f32 %v1033, %v1052
      %v1054 = vmul.f32 %v1034, %v1052
      %v1055 = vmul.f32 %v1035, %v1052
      %v1056 = vmul.f32 %v1036, %v1052
      %v1057 = vmul.f32 %v1037, %v1052
      %v1058 = vmul.f32 %v1038, %v1052
      %v1059 = vmul.f32 %v1039, %v1052
      %v1060 = vmul.f32 %v1040, %v1052
      %v1061 = vmul.f32 %v1041, %v1052
      %v1062 = vmul.f32 %v1042, %v1052
      %v1063 = vmul.f32 %v1043, %v1052
      %v1064 = vmul.f32 %v1044, %v1052
      %v1065 = vmul.f32 %v1045, %v1052
      %v1066 = vmul.f32 %v1046, %v1052
      %v1067 = vmul.f32 %v1047, %v1052
      %v1068 = vmul.f32 %v1048, %v1052
      %v1069 = vadd.f32 %v1016, %v1053
      %v1070 = vadd.f32 %v1017, %v1054
      %v1071 = vadd.f32 %v1018, %v1055
      %v1072 = vadd.f32 %v1019, %v1056
      %v1073 = vadd.f32 %v1020, %v1057
      %v1074 = vadd.f32 %v1021, %v1058
      %v1075 = vadd.f32 %v1022, %v1059
      %v1076 = vadd.f32 %v1023, %v1060
      %v1077 = vadd.f32 %v1024, %v1061
      %v1078 = vadd.f32 %v1025, %v1062
      %v1079 = vadd.f32 %v1026, %v1063
      %v1080 = vadd.f32 %v1027, %v1064
      %v1081 = vadd.f32 %v1028, %v1065
      %v1082 = vadd.f32 %v1029, %v1066
      %v1083 = vadd.f32 %v1030, %v1067
      %v1084 = vadd.f32 %v1031, %v1068
      %v1085 = vld [vmem:[%s183 + $0x6] sm:$0x1]
      %s1086 = scalar_lea.vmem [#allocation2], 240
      %v1087 = vld [vmem:[%s1086] sm:$0xff]
      %v1088 = vld [vmem:[%s1086 + $0x8] sm:$0xff]
      %v1089 = vld [vmem:[%s1086 + $0x18] sm:$0xff]
      %v1090 = vld [vmem:[%s1086 + $0x20] sm:$0xff]
      %v1091 = vld [vmem:[%s1086 + $0x30] sm:$0xff]
      %v1092 = vld [vmem:[%s1086 + $0x38] sm:$0xff]
      %v1093 = vld [vmem:[%s1086 + $0x48] sm:$0xff]
      %v1094 = vld [vmem:[%s1086 + $0x50] sm:$0xff]
      %v1095 = vld [vmem:[%s1086 + $0x60] sm:$0xff]
      %v1096 = vld [vmem:[%s1086 + $0x68] sm:$0xff]
      %v1097 = vld [vmem:[%s1086 + $0x78] sm:$0xff]
      %v1098 = vld [vmem:[%s1086 + $0x80] sm:$0xff]
      %v1099 = vld [vmem:[%s1086 + $0x90] sm:$0xff]
      %v1100 = vld [vmem:[%s1086 + $0x98] sm:$0xff]
      %v1101 = vld [vmem:[%s1086 + $0xa8] sm:$0xff]
      %v1102 = vld [vmem:[%s1086 + $0xb0] sm:$0xff]
      %v1103 = vlaneseq
      %v1104 = vshrl.u32 %v1103, 7
      %v1105 = vsub.s32 0, %v1104
      %v1106 = vrot.slane %v1085, %v1105
      %v1107 = vmul.f32 %v1087, %v1106
      %v1108 = vmul.f32 %v1088, %v1106
      %v1109 = vmul.f32 %v1089, %v1106
      %v1110 = vmul.f32 %v1090, %v1106
      %v1111 = vmul.f32 %v1091, %v1106
      %v1112 = vmul.f32 %v1092, %v1106
      %v1113 = vmul.f32 %v1093, %v1106
      %v1114 = vmul.f32 %v1094, %v1106
      %v1115 = vmul.f32 %v1095, %v1106
      %v1116 = vmul.f32 %v1096, %v1106
      %v1117 = vmul.f32 %v1097, %v1106
      %v1118 = vmul.f32 %v1098, %v1106
      %v1119 = vmul.f32 %v1099, %v1106
      %v1120 = vmul.f32 %v1100, %v1106
      %v1121 = vmul.f32 %v1101, %v1106
      %v1122 = vmul.f32 %v1102, %v1106
      %v1123 = vadd.f32 %v1069, %v1107
      %v1124 = vadd.f32 %v1070, %v1108
      %v1125 = vadd.f32 %v1071, %v1109
      %v1126 = vadd.f32 %v1072, %v1110
      %v1127 = vadd.f32 %v1073, %v1111
      %v1128 = vadd.f32 %v1074, %v1112
      %v1129 = vadd.f32 %v1075, %v1113
      %v1130 = vadd.f32 %v1076, %v1114
      %v1131 = vadd.f32 %v1077, %v1115
      %v1132 = vadd.f32 %v1078, %v1116
      %v1133 = vadd.f32 %v1079, %v1117
      %v1134 = vadd.f32 %v1080, %v1118
      %v1135 = vadd.f32 %v1081, %v1119
      %v1136 = vadd.f32 %v1082, %v1120
      %v1137 = vadd.f32 %v1083, %v1121
      %v1138 = vadd.f32 %v1084, %v1122
      %v1139 = vld [vmem:[%s183 + $0x7] sm:$0x1]
      %v1140 = vld [vmem:[%s1086 + $0x1] sm:$0xff]
      %v1141 = vld [vmem:[%s1086 + $0x9] sm:$0xff]
      %v1142 = vld [vmem:[%s1086 + $0x19] sm:$0xff]
      %v1143 = vld [vmem:[%s1086 + $0x21] sm:$0xff]
      %v1144 = vld [vmem:[%s1086 + $0x31] sm:$0xff]
      %v1145 = vld [vmem:[%s1086 + $0x39] sm:$0xff]
      %v1146 = vld [vmem:[%s1086 + $0x49] sm:$0xff]
      %v1147 = vld [vmem:[%s1086 + $0x51] sm:$0xff]
      %v1148 = vld [vmem:[%s1086 + $0x61] sm:$0xff]
      %v1149 = vld [vmem:[%s1086 + $0x69] sm:$0xff]
      %v1150 = vld [vmem:[%s1086 + $0x79] sm:$0xff]
      %v1151 = vld [vmem:[%s1086 + $0x81] sm:$0xff]
      %v1152 = vld [vmem:[%s1086 + $0x91] sm:$0xff]
      %v1153 = vld [vmem:[%s1086 + $0x99] sm:$0xff]
      %v1154 = vld [vmem:[%s1086 + $0xa9] sm:$0xff]
      %v1155 = vld [vmem:[%s1086 + $0xb1] sm:$0xff]
      %v1156 = vlaneseq
      %v1157 = vshrl.u32 %v1156, 7
      %v1158 = vsub.s32 0, %v1157
      %v1159 = vrot.slane %v1139, %v1158
      %v1160 = vmul.f32 %v1140, %v1159
      %v1161 = vmul.f32 %v1141, %v1159
      %v1162 = vmul.f32 %v1142, %v1159
      %v1163 = vmul.f32 %v1143, %v1159
      %v1164 = vmul.f32 %v1144, %v1159
      %v1165 = vmul.f32 %v1145, %v1159
      %v1166 = vmul.f32 %v1146, %v1159
      %v1167 = vmul.f32 %v1147, %v1159
      %v1168 = vmul.f32 %v1148, %v1159
      %v1169 = vmul.f32 %v1149, %v1159
      %v1170 = vmul.f32 %v1150, %v1159
      %v1171 = vmul.f32 %v1151, %v1159
      %v1172 = vmul.f32 %v1152, %v1159
      %v1173 = vmul.f32 %v1153, %v1159
      %v1174 = vmul.f32 %v1154, %v1159
      %v1175 = vmul.f32 %v1155, %v1159
      %v1176 = vadd.f32 %v1123, %v1160
      %v1177 = vadd.f32 %v1124, %v1161
      %v1178 = vadd.f32 %v1125, %v1162
      %v1179 = vadd.f32 %v1126, %v1163
      %v1180 = vadd.f32 %v1127, %v1164
      %v1181 = vadd.f32 %v1128, %v1165
      %v1182 = vadd.f32 %v1129, %v1166
      %v1183 = vadd.f32 %v1130, %v1167
      %v1184 = vadd.f32 %v1131, %v1168
      %v1185 = vadd.f32 %v1132, %v1169
      %v1186 = vadd.f32 %v1133, %v1170
      %v1187 = vadd.f32 %v1134, %v1171
      %v1188 = vadd.f32 %v1135, %v1172
      %v1189 = vadd.f32 %v1136, %v1173
      %v1190 = vadd.f32 %v1137, %v1174
      %v1191 = vadd.f32 %v1138, %v1175
      %v1192 = vld [vmem:[%s183 + $0x8] sm:$0x1]
      %v1193 = vld [vmem:[%s1086 + $0x2] sm:$0xff]
      %v1194 = vld [vmem:[%s1086 + $0xa] sm:$0xff]
      %v1195 = vld [vmem:[%s1086 + $0x1a] sm:$0xff]
      %v1196 = vld [vmem:[%s1086 + $0x22] sm:$0xff]
      %v1197 = vld [vmem:[%s1086 + $0x32] sm:$0xff]
      %v1198 = vld [vmem:[%s1086 + $0x3a] sm:$0xff]
      %v1199 = vld [vmem:[%s1086 + $0x4a] sm:$0xff]
      %v1200 = vld [vmem:[%s1086 + $0x52] sm:$0xff]
      %v1201 = vld [vmem:[%s1086 + $0x62] sm:$0xff]
      %v1202 = vld [vmem:[%s1086 + $0x6a] sm:$0xff]
      %v1203 = vld [vmem:[%s1086 + $0x7a] sm:$0xff]
      %v1204 = vld [vmem:[%s1086 + $0x82] sm:$0xff]
      %v1205 = vld [vmem:[%s1086 + $0x92] sm:$0xff]
      %v1206 = vld [vmem:[%s1086 + $0x9a] sm:$0xff]
      %v1207 = vld [vmem:[%s1086 + $0xaa] sm:$0xff]
      %v1208 = vld [vmem:[%s1086 + $0xb2] sm:$0xff]
      %v1209 = vlaneseq
      %v1210 = vshrl.u32 %v1209, 7
      %v1211 = vsub.s32 0, %v1210
      %v1212 = vrot.slane %v1192, %v1211
      %v1213 = vmul.f32 %v1193, %v1212
      %v1214 = vmul.f32 %v1194, %v1212
      %v1215 = vmul.f32 %v1195, %v1212
      %v1216 = vmul.f32 %v1196, %v1212
      %v1217 = vmul.f32 %v1197, %v1212
      %v1218 = vmul.f32 %v1198, %v1212
      %v1219 = vmul.f32 %v1199, %v1212
      %v1220 = vmul.f32 %v1200, %v1212
      %v1221 = vmul.f32 %v1201, %v1212
      %v1222 = vmul.f32 %v1202, %v1212
      %v1223 = vmul.f32 %v1203, %v1212
      %v1224 = vmul.f32 %v1204, %v1212
      %v1225 = vmul.f32 %v1205, %v1212
      %v1226 = vmul.f32 %v1206, %v1212
      %v1227 = vmul.f32 %v1207, %v1212
      %v1228 = vmul.f32 %v1208, %v1212
      %v1229 = vadd.f32 %v1176, %v1213
      %v1230 = vadd.f32 %v1177, %v1214
      %v1231 = vadd.f32 %v1178, %v1215
      %v1232 = vadd.f32 %v1179, %v1216
      %v1233 = vadd.f32 %v1180, %v1217
      %v1234 = vadd.f32 %v1181, %v1218
      %v1235 = vadd.f32 %v1182, %v1219
      %v1236 = vadd.f32 %v1183, %v1220
      %v1237 = vadd.f32 %v1184, %v1221
      %v1238 = vadd.f32 %v1185, %v1222
      %v1239 = vadd.f32 %v1186, %v1223
      %v1240 = vadd.f32 %v1187, %v1224
      %v1241 = vadd.f32 %v1188, %v1225
      %v1242 = vadd.f32 %v1189, %v1226
      %v1243 = vadd.f32 %v1190, %v1227
      %v1244 = vadd.f32 %v1191, %v1228
      %s1245 = scalar_lea.vmem %s191, 128
      %1246 = vst.msk [vmem:[%s1245] sm:$0xff] %vm192, %v1229
      %1247 = vst.msk [vmem:[%s1245 + $0x8] sm:$0xff] %vm192, %v1230
      %1248 = vst.msk [vmem:[%s1245 + $0x10] sm:$0xff] %vm192, %v1231
      %1249 = vst.msk [vmem:[%s1245 + $0x18] sm:$0xff] %vm192, %v1232
      %1250 = vst.msk [vmem:[%s1245 + $0x20] sm:$0xff] %vm192, %v1233
      %1251 = vst.msk [vmem:[%s1245 + $0x28] sm:$0xff] %vm192, %v1234
      %1252 = vst.msk [vmem:[%s1245 + $0x30] sm:$0xff] %vm192, %v1235
      %1253 = vst.msk [vmem:[%s1245 + $0x38] sm:$0xff] %vm192, %v1236
      %1254 = vst.msk [vmem:[%s1245 + $0x40] sm:$0xff] %vm192, %v1237
      %1255 = vst.msk [vmem:[%s1245 + $0x48] sm:$0xff] %vm192, %v1238
      %1256 = vst.msk [vmem:[%s1245 + $0x50] sm:$0xff] %vm192, %v1239
      %1257 = vst.msk [vmem:[%s1245 + $0x58] sm:$0xff] %vm192, %v1240
      %1258 = vst.msk [vmem:[%s1245 + $0x60] sm:$0xff] %vm192, %v1241
      %1259 = vst.msk [vmem:[%s1245 + $0x68] sm:$0xff] %vm192, %v1242
      %1260 = vst.msk [vmem:[%s1245 + $0x70] sm:$0xff] %vm192, %v1243
      %1261 = vst.msk [vmem:[%s1245 + $0x78] sm:$0xff] %vm192, %v1244
      %p1262 = scmp.lt.s32.totalorder %s17, 1
      %s1263 = scalar_select %p1262, %s17, 1
      %p1264 = scmp.lt.s32.totalorder %s18, 0
      %s1265 = scalar_select %p1264, %s18, 0
      %s1266 = smul.addr %s1263, 32
      %s1267 = sadd.s32 %s1265, %s1266
      %s1268 = smul.addr %s1267, 8
      %s1269 = scalar_lea.vmem %s2, %s1268
      // Predicated region
      $region29: #{tpu_custom_call.1} parent=27 // pred_check
        %p1270 = pneg %p99
      $region30: #{tpu_custom_call.1} parent=27 // pred_check_branch
        %1272 = sbr.rel (%p1270) target = $region32
      $region31: #{tpu_custom_call.1} parent=27 // pred_region
        _
      $region32: #{tpu_custom_call.1} parent=27 // pred_fallthru
        _
    $region28: #{tpu_custom_call.1} parent=5 // pred_fallthru
      _
    %p1273 = scmp.le.s32.totalorder 2, %s8
    // Predicated region
    $region33: #{tpu_custom_call.1} parent=5 // pred_check
      %p1274 = pneg %p1273
    $region34: #{tpu_custom_call.1} parent=5 // pred_check_branch
      %1276 = sbr.rel (%p1274) target = $region36
    $region35: #{tpu_custom_call.1} parent=5 // pred_region
      %s1277 = ssub.s32 %s8, 2
      // Predicated region
      $region37: #{tpu_custom_call.1} parent=35 // pred_check
        %p1278 = pneg %p105
      $region38: #{tpu_custom_call.1} parent=35 // pred_check_branch
        %1280 = sbr.rel (%p1278) target = $region40
      $region39: #{tpu_custom_call.1} parent=35 // pred_region
        %p1281 = scmp.lt.s32.totalorder %s19, 1
        %s1282 = scalar_select %p1281, %s19, 1
        %p1283 = scmp.lt.s32.totalorder %s20, 0
        %s1284 = scalar_select %p1283, %s20, 0
        %s1285 = smul.addr %s1282, 32
        %s1286 = sadd.s32 %s1284, %s1285
        %s1287 = smul.addr %s1286, 8
        %s1288 = scalar_lea.vmem %s2, %s1287
      $region40: #{tpu_custom_call.1} parent=35 // pred_fallthru
        _
    $region36: #{tpu_custom_call.1} parent=5 // pred_fallthru
      _
  $region6: #{tpu_custom_call.1} parent=0 // loop_footer
    %s12 = sadd.s32 1, %s8
  $region7: #{tpu_custom_call.1} parent=0 // loop_footer_branch
    %7 = sbr.rel target = $region3
  $region8: #{tpu_custom_call.1} parent=0 // loop_exit
    _

</llo_original>
